<compile_context>
chip_gen: v7x
topology: tpu7x:2x2x1
jax: 0.10.0
libtpu: 0.0.40
codegen_flags: <defaults>
</compile_context>

<pallas_src>
import math
import functools

import jax
import jax.numpy as jnp
from jax.experimental import pallas as pl
from jax.experimental.pallas import tpu as pltpu


def bert_attention_kernel(xs_ref, xf_ref, mask_ref,
                          wq_ref, bq_ref, wkv_ref, bkv_ref,
                          wog_ref, bo_ref, gamma_ref, beta_ref,
                          o_ref,
                          k_scratch, v_scratch, q_scratch, acc_ref,
                          *, num_heads, head_dim, heads_per_group):
    # One grid step == (one batch element, one query tile).
    H = num_heads * head_dim
    hd = head_dim
    gw = heads_per_group * hd
    n_groups = num_heads // heads_per_group
    qi = pl.program_id(1)

    # ---- K/V projection: once per batch element, cached in VMEM scratch ----
    @pl.when(qi == 0)
    def _():
        xf_b = xf_ref[0]                                    # (S, H) bf16 (wrapper cast)
        kv = (jnp.dot(xf_b, wkv_ref[...],
                      preferred_element_type=jnp.float32) + bkv_ref[...])  # (S, 2H)
        for gi in range(n_groups):                          # static; runs once per b
            k_scratch[gi] = kv[:, gi * gw:(gi + 1) * gw].astype(jnp.bfloat16)
            v_scratch[gi] = kv[:, H + gi * gw:H + (gi + 1) * gw].astype(jnp.bfloat16)

    xs = xs_ref[0]                                          # (Tq, H) query slab
    x_f32 = xs.astype(jnp.float32)                          # residual / LayerNorm in f32
    Tq = xs.shape[0]
    S = xf_ref.shape[1]

    # Q projection for this query slab only; 1/sqrt(head_dim) already folded
    # into wq / bq in the wrapper.
    q = (jnp.dot(xs.astype(jnp.bfloat16), wq_ref[...],
                 preferred_element_type=jnp.float32) + bq_ref[...])        # (Tq, H)
    for gi in range(n_groups):                              # lane-aligned group slabs
        q_scratch[gi] = q[:, gi * gw:(gi + 1) * gw].astype(jnp.bfloat16)

    # Additive attention-mask broadcast hoisted out of the head loop
    # (JAX does not CSE broadcast_in_dim).
    mask_b = jnp.broadcast_to(mask_ref[0].astype(jnp.float32), (Tq, S))

    # Output accumulator: residual + output bias; the group loop accumulates
    # each group's partial output projection (ctx_g @ Wo[g]) into it.
    acc_ref[...] = x_f32 + bo_ref[...]

    # Contract last dims of q and k -> no per-head transpose (XLU) needed.
    dn = (((1,), (1,)), ((), ()))

    def group_body(g, carry):
        q_g = q_scratch[g]                                  # (Tq, gw) bf16
        k_g = k_scratch[g]                                  # (S,  gw) bf16
        v_g = v_scratch[g]                                  # (S,  gw) bf16
        ctx_parts = []
        for h in range(heads_per_group):
            sl = slice(h * hd, (h + 1) * hd)
            s = jax.lax.dot_general(q_g[:, sl], k_g[:, sl], dn,
                                    preferred_element_type=jnp.float32)    # (Tq, S)
            s = s + mask_b
            # numerically-stable softmax along the key axis
            s = s - jnp.max(s, axis=-1, keepdims=True)
            p = jnp.exp(s)
            p = p * pl.reciprocal(jnp.sum(p, axis=-1, keepdims=True), approx=True)
            ctx_parts.append(jnp.dot(p.astype(jnp.bfloat16), v_g[:, sl],
                                     preferred_element_type=jnp.float32))
        ctx_g = (jnp.concatenate(ctx_parts, axis=-1) if heads_per_group > 1
                 else ctx_parts[0]).astype(jnp.bfloat16)    # (Tq, gw) lane-dense
        # Partial output projection for this group's rows of Wo.
        acc_ref[...] += jnp.dot(ctx_g, wog_ref[g],
                                preferred_element_type=jnp.float32)
        return carry

    unroll = 2 if (n_groups > 1 and n_groups % 2 == 0) else 1
    jax.lax.fori_loop(0, n_groups, group_body, 0, unroll=unroll)

    # BertSelfOutput LayerNorm (dropout = identity in eval mode).
    y = acc_ref[...]
    mean = jnp.mean(y, axis=-1, keepdims=True)
    var = jnp.mean((y - mean) ** 2, axis=-1, keepdims=True)
    yhat = (y - mean) * jax.lax.rsqrt(var + 1e-12)
    o_ref[0] = (yhat * gamma_ref[...] + beta_ref[...]).astype(o_ref.dtype)


def _pick_heads_per_group(num_heads, head_dim):
    """Smallest head-group whose width is a multiple of 128 lanes; fall back to
    a single full-width group for small hidden sizes."""
    for g in range(1, num_heads + 1):
        if num_heads % g == 0 and (g * head_dim) % 128 == 0:
            return g
    return num_heads


def _pick_q_block(S):
    """Largest divisor of S that is <= 512, preferring multiples of 256 (MXU M)."""
    if S <= 512:
        return S
    divs = [d for d in range(1, S + 1) if S % d == 0 and d <= 512]
    mult256 = [d for d in divs if d % 256 == 0]
    if mult256:
        return max(mult256)
    mult8 = [d for d in divs if d % 8 == 0]
    return max(mult8) if mult8 else max(divs)


def bert_attention(hidden_states, attention_mask, params, *, num_heads,
                   q_block=None):
    """hidden_states: (B, S, H);  attention_mask: (B, 1, 1, S) additive mask."""
    B, S, H = hidden_states.shape
    head_dim = H // num_heads
    if q_block is None:
        q_block = _pick_q_block(S)
    assert S % q_block == 0, "q_block must divide the sequence length"
    assert q_block == S or q_block % 8 == 0, "q_block must be a multiple of 8"
    n_q = S // q_block

    hpg = _pick_heads_per_group(num_heads, head_dim)
    gw = hpg * head_dim
    n_groups = num_heads // hpg

    mask3 = attention_mask.reshape(B, 1, S).astype(jnp.float32)

    bf16, f32 = jnp.bfloat16, jnp.float32
    scale = 1.0 / math.sqrt(head_dim)
    # Fold the 1/sqrt(head_dim) score scale into the Q projection once.
    wq = (params["wq"] * scale).astype(bf16)
    bq = (params["bq"] * scale).astype(f32)
    wkv = jnp.concatenate([params["wk"], params["wv"]], axis=1).astype(bf16)
    bkv = jnp.concatenate([params["bk"], params["bv"]], axis=1).astype(f32)
    # Wo split by head group so the output projection can be accumulated
    # per group inside the kernel (no (Tq, H) context re-gather).
    wog = params["wo"].reshape(n_groups, gw, H).astype(bf16)
    bo = params["bo"].astype(f32)
    gamma = params["gamma"].astype(f32)
    beta = params["beta"].astype(f32)

    # Full-sequence K/V source streamed in bf16 (halves HBM bytes + VMEM).
    x_kv_bf16 = hidden_states.astype(bf16)

    kernel = functools.partial(bert_attention_kernel,
                               num_heads=num_heads, head_dim=head_dim,
                               heads_per_group=hpg)

    def fixed(shape):
        return pl.BlockSpec(shape, lambda b, qi: (0,) * len(shape))

    itemsize = hidden_states.dtype.itemsize

    # --- VMEM budget derived from the actual resident set (double buffers,
    # scratch, and the live per-group score tensors), clamped by capacity. ---
    est = (
        2 * q_block * H * itemsize          # query slab (double-buffered)
        + 2 * S * H * 2                     # bf16 full-sequence input
        + 2 * S * 4                         # mask
        + 2 * (4 * H * H * 2 + 8 * H * 4)   # weights (bf16) + biases (f32), 2 buffers
        + 2 * S * H * 2                     # K + V scratch (bf16)
        + q_block * H * 2                   # Q scratch (bf16)
        + q_block * H * 4                   # output accumulator (f32)
        + 2 * q_block * H * itemsize        # output (double-buffered)
        + 2 * hpg * q_block * S * 4         # live scores/probs (~1 unrolled pair)
    )
    vmem_limit = max(int(1.3 * est) + (4 << 20), 32 << 20)
    try:
        cap = int(pltpu.get_tpu_info().vmem_capacity_bytes)
        vmem_limit = min(vmem_limit, cap - (8 << 20))
    except Exception:
        vmem_limit = min(vmem_limit, 64 << 20)

    # --- Cost estimate (KV projection counted once per batch element). ---
    flops = int(B * (8 * S * H * H + 4 * S * S * H))
    transcendentals = int(B * num_heads * S * S)
    bytes_accessed = int(B * S * H * itemsize        # query slabs (read)
                         + B * S * H * 2             # bf16 K/V source (read)
                         + B * S * H * itemsize      # output (write)
                         + B * S * 4                 # mask
                         + 4 * H * H * 2             # bf16 weights
                         + 8 * H * 4)                # biases / LN params

    dim_sem = ("parallel", "arbitrary") if n_q > 1 else ("parallel", "parallel")

    # NOTE: weight blocks have a constant index map, so Pallas only DMAs them
    # once; their double-buffer allocation remains (pl.Buffered(1) not used to
    # stay conservative about lowering support).
    return pl.pallas_call(
        kernel,
        out_shape=jax.ShapeDtypeStruct((B, S, H), hidden_states.dtype),
        grid_spec=pltpu.PrefetchScalarGridSpec(
            num_scalar_prefetch=0,
            grid=(B, n_q),
            in_specs=[
                pl.BlockSpec((1, q_block, H), lambda b, qi: (b, qi, 0)),  # x slab (f32)
                pl.BlockSpec((1, S, H), lambda b, qi: (b, 0, 0)),         # x full (bf16)
                pl.BlockSpec((1, 1, S), lambda b, qi: (b, 0, 0)),         # mask
                fixed((H, H)), fixed((1, H)),               # Wq, bq (scale folded)
                fixed((H, 2 * H)), fixed((1, 2 * H)),       # W_kv, b_kv (fused)
                fixed((n_groups, gw, H)), fixed((1, H)),    # Wo (grouped), bo
                fixed((1, H)), fixed((1, H)),               # gamma, beta
            ],
            out_specs=pl.BlockSpec((1, q_block, H), lambda b, qi: (b, qi, 0)),
            scratch_shapes=[
                pltpu.VMEM((n_groups, S, gw), jnp.bfloat16),        # K cache
                pltpu.VMEM((n_groups, S, gw), jnp.bfloat16),        # V cache
                pltpu.VMEM((n_groups, q_block, gw), jnp.bfloat16),  # Q (grouped)
                pltpu.VMEM((q_block, H), jnp.float32),              # out accumulator
            ]),
        compiler_params=pltpu.CompilerParams(
            dimension_semantics=dim_sem,
            vmem_limit_bytes=vmem_limit),
        cost_estimate=pl.CostEstimate(flops=flops,
                                      transcendentals=transcendentals,
                                      bytes_accessed=bytes_accessed),
    )(hidden_states, x_kv_bf16, mask3,
      wq, bq, wkv, bkv, wog, bo, gamma, beta)


def bert_attention_ref(hidden_states, attention_mask, params, *, num_heads):
    """Pure-JAX f32 reference mirroring the PyTorch forward (eval mode)."""
    B, S, H = hidden_states.shape
    hd = H // num_heads
    x = hidden_states.astype(jnp.float32)

    def proj(w, b):
        return x @ w + b                                    # (B, S, H)

    q = proj(params["wq"], params["bq"]).reshape(B, S, num_heads, hd).transpose(0, 2, 1, 3)
    k = proj(params["wk"], params["bk"]).reshape(B, S, num_heads, hd).transpose(0, 2, 1, 3)
    v = proj(params["wv"], params["bv"]).reshape(B, S, num_heads, hd).transpose(0, 2, 1, 3)

    scores = jnp.einsum("bhqd,bhkd->bhqk", q, k) / math.sqrt(hd)
    scores = scores + attention_mask.astype(jnp.float32)    # (B,1,1,S) broadcast
    probs = jax.nn.softmax(scores, axis=-1)
    ctx = jnp.einsum("bhqk,bhkd->bhqd", probs, v).transpose(0, 2, 1, 3).reshape(B, S, H)

    out = ctx @ params["wo"] + params["bo"]
    y = out + x
    mean = jnp.mean(y, axis=-1, keepdims=True)
    var = jnp.mean((y - mean) ** 2, axis=-1, keepdims=True)
    yhat = (y - mean) / jnp.sqrt(var + 1e-12)
    return yhat * params["gamma"] + params["beta"]


def init_params(key, hidden_size):
    ks = jax.random.split(key, 8)
    std = 0.02
    H = hidden_size
    return {
        "wq": std * jax.random.normal(ks[0], (H, H), jnp.float32),
        "bq": std * jax.random.normal(ks[1], (1, H), jnp.float32),
        "wk": std * jax.random.normal(ks[2], (H, H), jnp.float32),
        "bk": std * jax.random.normal(ks[3], (1, H), jnp.float32),
        "wv": std * jax.random.normal(ks[4], (H, H), jnp.float32),
        "bv": std * jax.random.normal(ks[5], (1, H), jnp.float32),
        "wo": std * jax.random.normal(ks[6], (H, H), jnp.float32),
        "bo": std * jax.random.normal(ks[7], (1, H), jnp.float32),
        "gamma": jnp.ones((1, H), jnp.float32),
        "beta": jnp.zeros((1, H), jnp.float32),
    }


if __name__ == "__main__":
    B, S, H, NH = 2, 8, 32, 4   # batch, seq, hidden, num_attention_heads

    key = jax.random.PRNGKey(0)
    k_x, k_m, k_p = jax.random.split(key, 3)

    hidden_states = jax.random.normal(k_x, (B, S, H), jnp.float32)
    # Standard extended BERT mask: 0 for attend, -10000 for masked positions.
    keep = (jax.random.uniform(k_m, (B, 1, 1, S)) > 0.2).astype(jnp.float32)
    attention_mask = (1.0 - keep) * -10000.0

    params = init_params(k_p, H)

    out = bert_attention(hidden_states, attention_mask, params, num_heads=NH)
    out = jax.block_until_ready(out)

    ref = bert_attention_ref(hidden_states, attention_mask, params, num_heads=NH)
    # Tolerance loosened vs. pure-f32 because matmuls run with bf16 inputs
    # (f32 accumulation) and the softmax uses the approx EUP reciprocal.
    max_err = float(jnp.max(jnp.abs(out - ref)))
    assert jnp.allclose(out, ref, atol=1e-2, rtol=1e-2), max_err

    print("KERNEL_OK")
</pallas_src>

<mosaic_0001>
module attributes {stable_mosaic.version = 11 : i64} {
  func.func @bert_attention_kernel(%arg0: i32, %arg1: i32, %arg2: memref<1x8x32xf32, #tpu.memory_space<vmem>>, %arg3: memref<1x8x32xbf16, #tpu.memory_space<vmem>>, %arg4: memref<1x1x8xf32, #tpu.memory_space<vmem>>, %arg5: memref<32x32xbf16, #tpu.memory_space<vmem>>, %arg6: memref<1x32xf32, #tpu.memory_space<vmem>>, %arg7: memref<32x64xbf16, #tpu.memory_space<vmem>>, %arg8: memref<1x64xf32, #tpu.memory_space<vmem>>, %arg9: memref<1x32x32xbf16, #tpu.memory_space<vmem>>, %arg10: memref<1x32xf32, #tpu.memory_space<vmem>>, %arg11: memref<1x32xf32, #tpu.memory_space<vmem>>, %arg12: memref<1x32xf32, #tpu.memory_space<vmem>>, %arg13: memref<1x8x32xf32, #tpu.memory_space<vmem>>, %arg14: memref<1x8x32xbf16, #tpu.memory_space<vmem>>, %arg15: memref<1x8x32xbf16, #tpu.memory_space<vmem>>, %arg16: memref<1x8x32xbf16, #tpu.memory_space<vmem>>, %arg17: memref<8x32xf32, #tpu.memory_space<vmem>>) attributes {dimension_semantics = [#tpu.dimension_semantics<parallel>, #tpu.dimension_semantics<parallel>], iteration_bounds = array<i64: 2, 1>, scalar_prefetch = 0 : i64, scratch_operands = 4 : i64, tpu.core_type = #tpu.core_type<tc>, window_params = [{transform_indices = @transform_0, window_bounds = array<i64: 1, 8, 32>}, {transform_indices = @transform_1, window_bounds = array<i64: 1, 8, 32>}, {transform_indices = @transform_2, window_bounds = array<i64: 1, 1, 8>}, {pipeline_mode = #tpu.pipeline_mode<synchronous>, transform_indices = @transform_3, window_bounds = array<i64: 32, 32>}, {pipeline_mode = #tpu.pipeline_mode<synchronous>, transform_indices = @transform_4, window_bounds = array<i64: 1, 32>}, {pipeline_mode = #tpu.pipeline_mode<synchronous>, transform_indices = @transform_5, window_bounds = array<i64: 32, 64>}, {pipeline_mode = #tpu.pipeline_mode<synchronous>, transform_indices = @transform_6, window_bounds = array<i64: 1, 64>}, {pipeline_mode = #tpu.pipeline_mode<synchronous>, transform_indices = @transform_7, window_bounds = array<i64: 1, 32, 32>}, {pipeline_mode = #tpu.pipeline_mode<synchronous>, transform_indices = @transform_8, window_bounds = array<i64: 1, 32>}, {pipeline_mode = #tpu.pipeline_mode<synchronous>, transform_indices = @transform_9, window_bounds = array<i64: 1, 32>}, {pipeline_mode = #tpu.pipeline_mode<synchronous>, transform_indices = @transform_10, window_bounds = array<i64: 1, 32>}, {transform_indices = @transform_11, window_bounds = array<i64: 1, 8, 32>}]} {
    %c0_i32 = arith.constant 0 : i32
    %0 = arith.cmpi eq, %arg1, %c0_i32 : i32
    %1 = arith.extui %0 : i1 to i32
    %c0_i32_0 = arith.constant 0 : i32
    %2 = arith.cmpi ne, %1, %c0_i32_0 : i32
    scf.if %2 {
      %c0_61 = arith.constant 0 : index
      %c0_62 = arith.constant 0 : index
      %c0_63 = arith.constant 0 : index
      %137 = vector.load %arg3[%c0_61, %c0_62, %c0_63] : memref<1x8x32xbf16, #tpu.memory_space<vmem>>, vector<1x8x32xbf16>
      %138 = vector.shape_cast %137 : vector<1x8x32xbf16> to vector<8x32xbf16>
      %c0_64 = arith.constant 0 : index
      %c0_65 = arith.constant 0 : index
      %139 = vector.load %arg7[%c0_64, %c0_65] : memref<32x64xbf16, #tpu.memory_space<vmem>>, vector<32x64xbf16>
      %cst_66 = arith.constant dense<0.000000e+00> : vector<8x64xf32>
      %140 = tpu.matmul %138, %139, %cst_66 {dimension_numbers = #tpu.dot_dimension_numbers<[1], [0], [0], [1], [0, 0, 1, 1], [], []>} : vector<8x32xbf16>, vector<32x64xbf16>, vector<8x64xf32> -> vector<8x64xf32>
      %c0_67 = arith.constant 0 : index
      %c0_68 = arith.constant 0 : index
      %141 = vector.load %arg8[%c0_67, %c0_68] : memref<1x64xf32, #tpu.memory_space<vmem>>, vector<1x64xf32>
      %142 = vector.broadcast %141 : vector<1x64xf32> to vector<8x64xf32>
      %143 = arith.addf %140, %142 : vector<8x64xf32>
      %144 = vector.extract_strided_slice %143 {offsets = [0, 0], sizes = [8, 32], strides = [1, 1]} : vector<8x64xf32> to vector<8x32xf32>
      %145 = arith.truncf %144 : vector<8x32xf32> to vector<8x32xbf16>
      %c0_69 = arith.constant 0 : index
      %c0_70 = arith.constant 0 : index
      %c0_71 = arith.constant 0 : index
      %146 = vector.load %arg14[%c0_69, %c0_70, %c0_71] : memref<1x8x32xbf16, #tpu.memory_space<vmem>>, vector<1x8x32xbf16>
      %147 = vector.shape_cast %146 : vector<1x8x32xbf16> to vector<8x32xbf16>
      %148 = vector.shape_cast %145 : vector<8x32xbf16> to vector<1x8x32xbf16>
      tpu.vector_store %arg14[%c0_69, %c0_70, %c0_71], %148 {strides = array<i32>} : memref<1x8x32xbf16, #tpu.memory_space<vmem>>, vector<1x8x32xbf16>,
      %149 = vector.extract_strided_slice %143 {offsets = [0, 32], sizes = [8, 32], strides = [1, 1]} : vector<8x64xf32> to vector<8x32xf32>
      %150 = arith.truncf %149 : vector<8x32xf32> to vector<8x32xbf16>
      %c0_72 = arith.constant 0 : index
      %c0_73 = arith.constant 0 : index
      %c0_74 = arith.constant 0 : index
      %151 = vector.load %arg15[%c0_72, %c0_73, %c0_74] : memref<1x8x32xbf16, #tpu.memory_space<vmem>>, vector<1x8x32xbf16>
      %152 = vector.shape_cast %151 : vector<1x8x32xbf16> to vector<8x32xbf16>
      %153 = vector.shape_cast %150 : vector<8x32xbf16> to vector<1x8x32xbf16>
      tpu.vector_store %arg15[%c0_72, %c0_73, %c0_74], %153 {strides = array<i32>} : memref<1x8x32xbf16, #tpu.memory_space<vmem>>, vector<1x8x32xbf16>,
    } else {
    }
    %c0 = arith.constant 0 : index
    %c0_1 = arith.constant 0 : index
    %c0_2 = arith.constant 0 : index
    %3 = vector.load %arg2[%c0, %c0_1, %c0_2] : memref<1x8x32xf32, #tpu.memory_space<vmem>>, vector<1x8x32xf32>
    %4 = vector.shape_cast %3 : vector<1x8x32xf32> to vector<8x32xf32>
    %5 = arith.truncf %4 : vector<8x32xf32> to vector<8x32xbf16>
    %c0_3 = arith.constant 0 : index
    %c0_4 = arith.constant 0 : index
    %6 = vector.load %arg5[%c0_3, %c0_4] : memref<32x32xbf16, #tpu.memory_space<vmem>>, vector<32x32xbf16>
    %cst = arith.constant dense<0.000000e+00> : vector<8x32xf32>
    %7 = tpu.matmul %5, %6, %cst {dimension_numbers = #tpu.dot_dimension_numbers<[1], [0], [0], [1], [0, 0, 1, 1], [], []>} : vector<8x32xbf16>, vector<32x32xbf16>, vector<8x32xf32> -> vector<8x32xf32>
    %c0_5 = arith.constant 0 : index
    %c0_6 = arith.constant 0 : index
    %8 = vector.load %arg6[%c0_5, %c0_6] : memref<1x32xf32, #tpu.memory_space<vmem>>, vector<1x32xf32>
    %9 = vector.broadcast %8 : vector<1x32xf32> to vector<8x32xf32>
    %10 = arith.addf %7, %9 : vector<8x32xf32>
    %11 = arith.truncf %10 : vector<8x32xf32> to vector<8x32xbf16>
    %c0_7 = arith.constant 0 : index
    %c0_8 = arith.constant 0 : index
    %c0_9 = arith.constant 0 : index
    %12 = vector.load %arg16[%c0_7, %c0_8, %c0_9] : memref<1x8x32xbf16, #tpu.memory_space<vmem>>, vector<1x8x32xbf16>
    %13 = vector.shape_cast %12 : vector<1x8x32xbf16> to vector<8x32xbf16>
    %14 = vector.shape_cast %11 : vector<8x32xbf16> to vector<1x8x32xbf16>
    tpu.vector_store %arg16[%c0_7, %c0_8, %c0_9], %14 {strides = array<i32>} : memref<1x8x32xbf16, #tpu.memory_space<vmem>>, vector<1x8x32xbf16>,
    %c0_10 = arith.constant 0 : index
    %c0_11 = arith.constant 0 : index
    %c0_12 = arith.constant 0 : index
    %15 = vector.load %arg4[%c0_10, %c0_11, %c0_12] : memref<1x1x8xf32, #tpu.memory_space<vmem>>, vector<1x1x8xf32>
    %16 = vector.shape_cast %15 : vector<1x1x8xf32> to vector<1x8xf32>
    %17 = vector.shape_cast %16 : vector<1x8xf32> to vector<1x8xf32>
    %18 = vector.broadcast %17 : vector<1x8xf32> to vector<8x8xf32>
    %c0_13 = arith.constant 0 : index
    %c0_14 = arith.constant 0 : index
    %19 = vector.load %arg10[%c0_13, %c0_14] : memref<1x32xf32, #tpu.memory_space<vmem>>, vector<1x32xf32>
    %20 = vector.broadcast %19 : vector<1x32xf32> to vector<8x32xf32>
    %21 = arith.addf %4, %20 : vector<8x32xf32>
    %c0_15 = arith.constant 0 : index
    %c0_16 = arith.constant 0 : index
    %22 = vector.load %arg17[%c0_15, %c0_16] : memref<8x32xf32, #tpu.memory_space<vmem>>, vector<8x32xf32>
    tpu.vector_store %arg17[%c0_15, %c0_16], %21 {strides = array<i32>} : memref<8x32xf32, #tpu.memory_space<vmem>>, vector<8x32xf32>,
    %c0_i32_17 = arith.constant 0 : i32
    %23 = arith.index_cast %c0_i32_17 : i32 to index
    %c0_18 = arith.constant 0 : index
    %c0_19 = arith.constant 0 : index
    %24 = vector.load %arg16[%23, %c0_18, %c0_19] : memref<1x8x32xbf16, #tpu.memory_space<vmem>>, vector<1x8x32xbf16>
    %25 = vector.shape_cast %24 : vector<1x8x32xbf16> to vector<8x32xbf16>
    %26 = arith.index_cast %c0_i32_17 : i32 to index
    %c0_20 = arith.constant 0 : index
    %c0_21 = arith.constant 0 : index
    %27 = vector.load %arg14[%26, %c0_20, %c0_21] : memref<1x8x32xbf16, #tpu.memory_space<vmem>>, vector<1x8x32xbf16>
    %28 = vector.shape_cast %27 : vector<1x8x32xbf16> to vector<8x32xbf16>
    %29 = arith.index_cast %c0_i32_17 : i32 to index
    %c0_22 = arith.constant 0 : index
    %c0_23 = arith.constant 0 : index
    %30 = vector.load %arg15[%29, %c0_22, %c0_23] : memref<1x8x32xbf16, #tpu.memory_space<vmem>>, vector<1x8x32xbf16>
    %31 = vector.shape_cast %30 : vector<1x8x32xbf16> to vector<8x32xbf16>
    %32 = vector.extract_strided_slice %25 {offsets = [0, 0], sizes = [8, 8], strides = [1, 1]} : vector<8x32xbf16> to vector<8x8xbf16>
    %33 = vector.extract_strided_slice %28 {offsets = [0, 0], sizes = [8, 8], strides = [1, 1]} : vector<8x32xbf16> to vector<8x8xbf16>
    %cst_24 = arith.constant dense<0.000000e+00> : vector<8x8xf32>
    %34 = tpu.matmul %32, %33, %cst_24 {dimension_numbers = #tpu.dot_dimension_numbers<[1], [1], [0], [0], [0, 0, 1, 0], [], []>} : vector<8x8xbf16>, vector<8x8xbf16>, vector<8x8xf32> -> vector<8x8xf32>
    %35 = arith.addf %34, %18 : vector<8x8xf32>
    %cst_25 = arith.constant dense<0xFF800000> : vector<8xf32>
    %36 = vector.multi_reduction <maximumf>, %35, %cst_25 [1] : vector<8x8xf32> to vector<8xf32>
    %37 = vector.shape_cast %36 : vector<8xf32> to vector<8x1xf32>
    %38 = vector.broadcast %37 : vector<8x1xf32> to vector<8x8xf32>
    %39 = arith.subf %35, %38 : vector<8x8xf32>
    %40 = math.exp %39 : vector<8x8xf32>
    %cst_26 = arith.constant dense<0.000000e+00> : vector<8xf32>
    %41 = vector.multi_reduction <add>, %40, %cst_26 [1] : vector<8x8xf32> to vector<8xf32>
    %42 = vector.shape_cast %41 : vector<8xf32> to vector<8x1xf32>
    %43 = tpu.reciprocal %42 {approx = true} : vector<8x1xf32> -> vector<8x1xf32>
    %44 = vector.broadcast %43 : vector<8x1xf32> to vector<8x8xf32>
    %45 = arith.mulf %40, %44 : vector<8x8xf32>
    %46 = arith.truncf %45 : vector<8x8xf32> to vector<8x8xbf16>
    %47 = vector.extract_strided_slice %31 {offsets = [0, 0], sizes = [8, 8], strides = [1, 1]} : vector<8x32xbf16> to vector<8x8xbf16>
    %cst_27 = arith.constant dense<0.000000e+00> : vector<8x8xf32>
    %48 = tpu.matmul %46, %47, %cst_27 {dimension_numbers = #tpu.dot_dimension_numbers<[1], [0], [0], [1], [0, 0, 1, 1], [], []>} : vector<8x8xbf16>, vector<8x8xbf16>, vector<8x8xf32> -> vector<8x8xf32>
    %49 = vector.extract_strided_slice %25 {offsets = [0, 8], sizes = [8, 8], strides = [1, 1]} : vector<8x32xbf16> to vector<8x8xbf16>
    %50 = vector.extract_strided_slice %28 {offsets = [0, 8], sizes = [8, 8], strides = [1, 1]} : vector<8x32xbf16> to vector<8x8xbf16>
    %cst_28 = arith.constant dense<0.000000e+00> : vector<8x8xf32>
    %51 = tpu.matmul %49, %50, %cst_28 {dimension_numbers = #tpu.dot_dimension_numbers<[1], [1], [0], [0], [0, 0, 1, 0], [], []>} : vector<8x8xbf16>, vector<8x8xbf16>, vector<8x8xf32> -> vector<8x8xf32>
    %52 = arith.addf %51, %18 : vector<8x8xf32>
    %cst_29 = arith.constant dense<0xFF800000> : vector<8xf32>
    %53 = vector.multi_reduction <maximumf>, %52, %cst_29 [1] : vector<8x8xf32> to vector<8xf32>
    %54 = vector.shape_cast %53 : vector<8xf32> to vector<8x1xf32>
    %55 = vector.broadcast %54 : vector<8x1xf32> to vector<8x8xf32>
    %56 = arith.subf %52, %55 : vector<8x8xf32>
    %57 = math.exp %56 : vector<8x8xf32>
    %cst_30 = arith.constant dense<0.000000e+00> : vector<8xf32>
    %58 = vector.multi_reduction <add>, %57, %cst_30 [1] : vector<8x8xf32> to vector<8xf32>
    %59 = vector.shape_cast %58 : vector<8xf32> to vector<8x1xf32>
    %60 = tpu.reciprocal %59 {approx = true} : vector<8x1xf32> -> vector<8x1xf32>
    %61 = vector.broadcast %60 : vector<8x1xf32> to vector<8x8xf32>
    %62 = arith.mulf %57, %61 : vector<8x8xf32>
    %63 = arith.truncf %62 : vector<8x8xf32> to vector<8x8xbf16>
    %64 = vector.extract_strided_slice %31 {offsets = [0, 8], sizes = [8, 8], strides = [1, 1]} : vector<8x32xbf16> to vector<8x8xbf16>
    %cst_31 = arith.constant dense<0.000000e+00> : vector<8x8xf32>
    %65 = tpu.matmul %63, %64, %cst_31 {dimension_numbers = #tpu.dot_dimension_numbers<[1], [0], [0], [1], [0, 0, 1, 1], [], []>} : vector<8x8xbf16>, vector<8x8xbf16>, vector<8x8xf32> -> vector<8x8xf32>
    %66 = vector.extract_strided_slice %25 {offsets = [0, 16], sizes = [8, 8], strides = [1, 1]} : vector<8x32xbf16> to vector<8x8xbf16>
    %67 = vector.extract_strided_slice %28 {offsets = [0, 16], sizes = [8, 8], strides = [1, 1]} : vector<8x32xbf16> to vector<8x8xbf16>
    %cst_32 = arith.constant dense<0.000000e+00> : vector<8x8xf32>
    %68 = tpu.matmul %66, %67, %cst_32 {dimension_numbers = #tpu.dot_dimension_numbers<[1], [1], [0], [0], [0, 0, 1, 0], [], []>} : vector<8x8xbf16>, vector<8x8xbf16>, vector<8x8xf32> -> vector<8x8xf32>
    %69 = arith.addf %68, %18 : vector<8x8xf32>
    %cst_33 = arith.constant dense<0xFF800000> : vector<8xf32>
    %70 = vector.multi_reduction <maximumf>, %69, %cst_33 [1] : vector<8x8xf32> to vector<8xf32>
    %71 = vector.shape_cast %70 : vector<8xf32> to vector<8x1xf32>
    %72 = vector.broadcast %71 : vector<8x1xf32> to vector<8x8xf32>
    %73 = arith.subf %69, %72 : vector<8x8xf32>
    %74 = math.exp %73 : vector<8x8xf32>
    %cst_34 = arith.constant dense<0.000000e+00> : vector<8xf32>
    %75 = vector.multi_reduction <add>, %74, %cst_34 [1] : vector<8x8xf32> to vector<8xf32>
    %76 = vector.shape_cast %75 : vector<8xf32> to vector<8x1xf32>
    %77 = tpu.reciprocal %76 {approx = true} : vector<8x1xf32> -> vector<8x1xf32>
    %78 = vector.broadcast %77 : vector<8x1xf32> to vector<8x8xf32>
    %79 = arith.mulf %74, %78 : vector<8x8xf32>
    %80 = arith.truncf %79 : vector<8x8xf32> to vector<8x8xbf16>
    %81 = vector.extract_strided_slice %31 {offsets = [0, 16], sizes = [8, 8], strides = [1, 1]} : vector<8x32xbf16> to vector<8x8xbf16>
    %cst_35 = arith.constant dense<0.000000e+00> : vector<8x8xf32>
    %82 = tpu.matmul %80, %81, %cst_35 {dimension_numbers = #tpu.dot_dimension_numbers<[1], [0], [0], [1], [0, 0, 1, 1], [], []>} : vector<8x8xbf16>, vector<8x8xbf16>, vector<8x8xf32> -> vector<8x8xf32>
    %83 = vector.extract_strided_slice %25 {offsets = [0, 24], sizes = [8, 8], strides = [1, 1]} : vector<8x32xbf16> to vector<8x8xbf16>
    %84 = vector.extract_strided_slice %28 {offsets = [0, 24], sizes = [8, 8], strides = [1, 1]} : vector<8x32xbf16> to vector<8x8xbf16>
    %cst_36 = arith.constant dense<0.000000e+00> : vector<8x8xf32>
    %85 = tpu.matmul %83, %84, %cst_36 {dimension_numbers = #tpu.dot_dimension_numbers<[1], [1], [0], [0], [0, 0, 1, 0], [], []>} : vector<8x8xbf16>, vector<8x8xbf16>, vector<8x8xf32> -> vector<8x8xf32>
    %86 = arith.addf %85, %18 : vector<8x8xf32>
    %cst_37 = arith.constant dense<0xFF800000> : vector<8xf32>
    %87 = vector.multi_reduction <maximumf>, %86, %cst_37 [1] : vector<8x8xf32> to vector<8xf32>
    %88 = vector.shape_cast %87 : vector<8xf32> to vector<8x1xf32>
    %89 = vector.broadcast %88 : vector<8x1xf32> to vector<8x8xf32>
    %90 = arith.subf %86, %89 : vector<8x8xf32>
    %91 = math.exp %90 : vector<8x8xf32>
    %cst_38 = arith.constant dense<0.000000e+00> : vector<8xf32>
    %92 = vector.multi_reduction <add>, %91, %cst_38 [1] : vector<8x8xf32> to vector<8xf32>
    %93 = vector.shape_cast %92 : vector<8xf32> to vector<8x1xf32>
    %94 = tpu.reciprocal %93 {approx = true} : vector<8x1xf32> -> vector<8x1xf32>
    %95 = vector.broadcast %94 : vector<8x1xf32> to vector<8x8xf32>
    %96 = arith.mulf %91, %95 : vector<8x8xf32>
    %97 = arith.truncf %96 : vector<8x8xf32> to vector<8x8xbf16>
    %98 = vector.extract_strided_slice %31 {offsets = [0, 24], sizes = [8, 8], strides = [1, 1]} : vector<8x32xbf16> to vector<8x8xbf16>
    %cst_39 = arith.constant dense<0.000000e+00> : vector<8x8xf32>
    %99 = tpu.matmul %97, %98, %cst_39 {dimension_numbers = #tpu.dot_dimension_numbers<[1], [0], [0], [1], [0, 0, 1, 1], [], []>} : vector<8x8xbf16>, vector<8x8xbf16>, vector<8x8xf32> -> vector<8x8xf32>
    %100 = tpu.concatenate %48, %65, %82, %99 in 1 : vector<8x8xf32>, vector<8x8xf32>, vector<8x8xf32>, vector<8x8xf32> -> vector<8x32xf32>
    %101 = arith.truncf %100 : vector<8x32xf32> to vector<8x32xbf16>
    %c0_40 = arith.constant 0 : index
    %c0_41 = arith.constant 0 : index
    %102 = vector.load %arg17[%c0_40, %c0_41] : memref<8x32xf32, #tpu.memory_space<vmem>>, vector<8x32xf32>
    %103 = arith.index_cast %c0_i32_17 : i32 to index
    %c0_42 = arith.constant 0 : index
    %c0_43 = arith.constant 0 : index
    %104 = vector.load %arg9[%103, %c0_42, %c0_43] : memref<1x32x32xbf16, #tpu.memory_space<vmem>>, vector<1x32x32xbf16>
    %105 = vector.shape_cast %104 : vector<1x32x32xbf16> to vector<32x32xbf16>
    %cst_44 = arith.constant dense<0.000000e+00> : vector<8x32xf32>
    %106 = tpu.matmul %101, %105, %cst_44 {dimension_numbers = #tpu.dot_dimension_numbers<[1], [0], [0], [1], [0, 0, 1, 1], [], []>} : vector<8x32xbf16>, vector<32x32xbf16>, vector<8x32xf32> -> vector<8x32xf32>
    %107 = arith.addf %102, %106 : vector<8x32xf32>
    %c0_45 = arith.constant 0 : index
    %c0_46 = arith.constant 0 : index
    %108 = vector.load %arg17[%c0_45, %c0_46] : memref<8x32xf32, #tpu.memory_space<vmem>>, vector<8x32xf32>
    tpu.vector_store %arg17[%c0_45, %c0_46], %107 {strides = array<i32>} : memref<8x32xf32, #tpu.memory_space<vmem>>, vector<8x32xf32>,
    %c1_i32 = arith.constant 1 : i32
    %c0_47 = arith.constant 0 : index
    %c0_48 = arith.constant 0 : index
    %109 = vector.load %arg17[%c0_47, %c0_48] : memref<8x32xf32, #tpu.memory_space<vmem>>, vector<8x32xf32>
    %cst_49 = arith.constant dense<0.000000e+00> : vector<8xf32>
    %110 = vector.multi_reduction <add>, %109, %cst_49 [1] : vector<8x32xf32> to vector<8xf32>
    %111 = vector.shape_cast %110 : vector<8xf32> to vector<8x1xf32>
    %cst_50 = arith.constant 3.200000e+01 : f32
    %112 = vector.broadcast %cst_50 : f32 to vector<8x1xf32>
    %113 = arith.divf %111, %112 : vector<8x1xf32>
    %114 = vector.broadcast %113 : vector<8x1xf32> to vector<8x32xf32>
    %115 = arith.subf %109, %114 : vector<8x32xf32>
    %116 = arith.mulf %115, %115 : vector<8x32xf32>
    %cst_51 = arith.constant dense<0.000000e+00> : vector<8xf32>
    %117 = vector.multi_reduction <add>, %116, %cst_51 [1] : vector<8x32xf32> to vector<8xf32>
    %118 = vector.shape_cast %117 : vector<8xf32> to vector<8x1xf32>
    %cst_52 = arith.constant 3.200000e+01 : f32
    %119 = vector.broadcast %cst_52 : f32 to vector<8x1xf32>
    %120 = arith.divf %118, %119 : vector<8x1xf32>
    %121 = vector.broadcast %113 : vector<8x1xf32> to vector<8x32xf32>
    %122 = arith.subf %109, %121 : vector<8x32xf32>
    %cst_53 = arith.constant 9.99999996E-13 : f32
    %123 = vector.broadcast %cst_53 : f32 to vector<8x1xf32>
    %124 = arith.addf %120, %123 : vector<8x1xf32>
    %125 = math.rsqrt %124 : vector<8x1xf32>
    %126 = vector.broadcast %125 : vector<8x1xf32> to vector<8x32xf32>
    %127 = arith.mulf %122, %126 : vector<8x32xf32>
    %c0_54 = arith.constant 0 : index
    %c0_55 = arith.constant 0 : index
    %128 = vector.load %arg11[%c0_54, %c0_55] : memref<1x32xf32, #tpu.memory_space<vmem>>, vector<1x32xf32>
    %129 = vector.broadcast %128 : vector<1x32xf32> to vector<8x32xf32>
    %130 = arith.mulf %127, %129 : vector<8x32xf32>
    %c0_56 = arith.constant 0 : index
    %c0_57 = arith.constant 0 : index
    %131 = vector.load %arg12[%c0_56, %c0_57] : memref<1x32xf32, #tpu.memory_space<vmem>>, vector<1x32xf32>
    %132 = vector.broadcast %131 : vector<1x32xf32> to vector<8x32xf32>
    %133 = arith.addf %130, %132 : vector<8x32xf32>
    %c0_58 = arith.constant 0 : index
    %c0_59 = arith.constant 0 : index
    %c0_60 = arith.constant 0 : index
    %134 = vector.load %arg13[%c0_58, %c0_59, %c0_60] : memref<1x8x32xf32, #tpu.memory_space<vmem>>, vector<1x8x32xf32>
    %135 = vector.shape_cast %134 : vector<1x8x32xf32> to vector<8x32xf32>
    %136 = vector.shape_cast %133 : vector<8x32xf32> to vector<1x8x32xf32>
    tpu.vector_store %arg13[%c0_58, %c0_59, %c0_60], %136 {strides = array<i32>} : memref<1x8x32xf32, #tpu.memory_space<vmem>>, vector<1x8x32xf32>,
    return
  }
  func.func @transform_0(%arg0: i32, %arg1: i32) -> (i32, i32, i32) {
    %c0_i32 = arith.constant 0 : i32
    %c0_i32_0 = arith.constant 0 : i32
    return %arg0, %arg1, %c0_i32 : i32, i32, i32
  }
  func.func @transform_1(%arg0: i32, %arg1: i32) -> (i32, i32, i32) {
    %c0_i32 = arith.constant 0 : i32
    %c0_i32_0 = arith.constant 0 : i32
    %c0_i32_1 = arith.constant 0 : i32
    return %arg0, %c0_i32, %c0_i32_0 : i32, i32, i32
  }
  func.func @transform_2(%arg0: i32, %arg1: i32) -> (i32, i32, i32) {
    %c0_i32 = arith.constant 0 : i32
    %c0_i32_0 = arith.constant 0 : i32
    %c0_i32_1 = arith.constant 0 : i32
    return %arg0, %c0_i32, %c0_i32_0 : i32, i32, i32
  }
  func.func @transform_3(%arg0: i32, %arg1: i32) -> (i32, i32) {
    %c0_i32 = arith.constant 0 : i32
    %c0_i32_0 = arith.constant 0 : i32
    %c0_i32_1 = arith.constant 0 : i32
    return %c0_i32, %c0_i32_0 : i32, i32
  }
  func.func @transform_4(%arg0: i32, %arg1: i32) -> (i32, i32) {
    %c0_i32 = arith.constant 0 : i32
    %c0_i32_0 = arith.constant 0 : i32
    %c0_i32_1 = arith.constant 0 : i32
    return %c0_i32, %c0_i32_0 : i32, i32
  }
  func.func @transform_5(%arg0: i32, %arg1: i32) -> (i32, i32) {
    %c0_i32 = arith.constant 0 : i32
    %c0_i32_0 = arith.constant 0 : i32
    %c0_i32_1 = arith.constant 0 : i32
    return %c0_i32, %c0_i32_0 : i32, i32
  }
  func.func @transform_6(%arg0: i32, %arg1: i32) -> (i32, i32) {
    %c0_i32 = arith.constant 0 : i32
    %c0_i32_0 = arith.constant 0 : i32
    %c0_i32_1 = arith.constant 0 : i32
    return %c0_i32, %c0_i32_0 : i32, i32
  }
  func.func @transform_7(%arg0: i32, %arg1: i32) -> (i32, i32, i32) {
    %c0_i32 = arith.constant 0 : i32
    %c0_i32_0 = arith.constant 0 : i32
    %c0_i32_1 = arith.constant 0 : i32
    %c0_i32_2 = arith.constant 0 : i32
    return %c0_i32, %c0_i32_0, %c0_i32_1 : i32, i32, i32
  }
  func.func @transform_8(%arg0: i32, %arg1: i32) -> (i32, i32) {
    %c0_i32 = arith.constant 0 : i32
    %c0_i32_0 = arith.constant 0 : i32
    %c0_i32_1 = arith.constant 0 : i32
    return %c0_i32, %c0_i32_0 : i32, i32
  }
  func.func @transform_9(%arg0: i32, %arg1: i32) -> (i32, i32) {
    %c0_i32 = arith.constant 0 : i32
    %c0_i32_0 = arith.constant 0 : i32
    %c0_i32_1 = arith.constant 0 : i32
    return %c0_i32, %c0_i32_0 : i32, i32
  }
  func.func @transform_10(%arg0: i32, %arg1: i32) -> (i32, i32) {
    %c0_i32 = arith.constant 0 : i32
    %c0_i32_0 = arith.constant 0 : i32
    %c0_i32_1 = arith.constant 0 : i32
    return %c0_i32, %c0_i32_0 : i32, i32
  }
  func.func @transform_11(%arg0: i32, %arg1: i32) -> (i32, i32, i32) {
    %c0_i32 = arith.constant 0 : i32
    %c0_i32_0 = arith.constant 0 : i32
    return %arg0, %arg1, %c0_i32 : i32, i32, i32
  }
}

</mosaic_0001>

<llo_original>
// kernel: tpu_custom_call.1
$region0: #{tpu_custom_call.1}
  #allocation0 [shape = 'u32[]', space=smem, size = 0x4, offset = 0x4, fixed_abs, tag = 'smem constant byte address 0x4 - core index']
  #allocation1 [shape = 'u32[144,128]{1,0:T(1,128)}', space=vmem, size = 0x12000, scoped, tag = 'internal scratch']
  #allocation2 [shape = 'bf16[1,8,32]{2,1,0:T(8,128)(2,1)}', space=vmem, size = 0x800, scoped, tag = 'scratch operand']
  #allocation3 [shape = 'bf16[1,8,32]{2,1,0:T(8,128)(2,1)}', space=vmem, size = 0x800, scoped, tag = 'scratch operand']
  #allocation4 [shape = 'bf16[1,8,32]{2,1,0:T(8,128)(2,1)}', space=vmem, size = 0x800, scoped, tag = 'scratch operand']
  #allocation5 [shape = 'f32[8,32]{1,0:T(8,128)}', space=vmem, size = 0x1000, scoped, tag = 'scratch operand']
  %s0 = inlined_call_operand.hbm [shape: f32[2,8,32], index: 0, kind: input, shape index: {}]
  %s1 = inlined_call_operand.hbm [shape: bf16[2,8,32], index: 1, kind: input, shape index: {}]
  %s2 = inlined_call_operand.vmem [shape: f32[2,1,8], index: 2, kind: input, shape index: {}]
  %s3 = inlined_call_operand.hbm [shape: bf16[32,32], index: 3, kind: input, shape index: {}]
  %s4 = inlined_call_operand.hbm [shape: f32[1,32], index: 4, kind: input, shape index: {}]
  %s5 = inlined_call_operand.vmem [shape: bf16[32,64], index: 5, kind: input, shape index: {}]
  %s6 = inlined_call_operand.vmem [shape: f32[1,64], index: 6, kind: input, shape index: {}]
  %s7 = inlined_call_operand.hbm [shape: bf16[1,32,32], index: 7, kind: input, shape index: {}]
  %s8 = inlined_call_operand.vmem [shape: f32[1,32], index: 8, kind: input, shape index: {}]
  %s9 = inlined_call_operand.vmem [shape: f32[1,32], index: 9, kind: input, shape index: {}]
  %s10 = inlined_call_operand.vmem [shape: f32[1,32], index: 10, kind: input, shape index: {}]
  %s11 = inlined_call_operand.hbm [shape: f32[2,8,32], index: 11, kind: output, shape index: {}]
  %s12 = sld [smem:[#allocation0]]
  $region101: #{tpu_custom_call.1} parent=0
    _
  %s14 = ssub.s32 1, %s12
  %s15 = scalar_select 0, %s14, %s12
  $region1: #{tpu_custom_call.1} parent=0
    #allocation6 [shape = 'u8[8192]{0}', space=vmem, size = 0x2000, scoped, tag = 'input window, operand 0']
    #allocation7 [shape = 's32[2]{0}', space=sflag, size = 0x8, scoped, tag = 'scoped memory for tpu_custom_call.1']
    #allocation8 [shape = 's32[2]{0}', space=sflag, size = 0x8, scoped, tag = 'scoped memory for tpu_custom_call.1']
    #allocation9 [shape = 'u8[4096]{0}', space=vmem, size = 0x1000, scoped, tag = 'input window, operand 1']
    #allocation10 [shape = 's32[2]{0}', space=sflag, size = 0x8, scoped, tag = 'scoped memory for tpu_custom_call.1']
    #allocation11 [shape = 'u8[8192]{0}', space=vmem, size = 0x2000, scoped, tag = 'input window, operand 3, single buffered']
    #allocation12 [shape = 'u8[512]{0}', space=vmem, size = 0x400, scoped, tag = 'input window, operand 4, single buffered']
    #allocation13 [shape = 's32[1]{0}', space=sflag, size = 0x4, scoped, tag = 'scoped memory for tpu_custom_call.1']
    #allocation14 [shape = 'u8[8192]{0}', space=vmem, size = 0x2000, scoped, tag = 'input window, operand 7, single buffered']
    #allocation15 [shape = 'u8[8192]{0}', space=vmem, size = 0x2000, scoped, tag = 'output window, operand 0']
    %16 = vsyncpa [#allocation7], 0
    %s17 = scalar_lea.sflag [#allocation7], 1
    %18 = vsyncpa %s17, 0
    %19 = vsyncpa [#allocation10], 0
    %s20 = scalar_lea.sflag [#allocation10], 1
    %21 = vsyncpa %s20, 0
    %22 = vsyncpa [#allocation13], 0
    %23 = vsyncpa [#allocation8], 0
    %s24 = scalar_lea.sflag [#allocation8], 1
    %25 = vsyncpa %s24, 0
    loop: start=0, step=1, limit=4
    $region2: #{tpu_custom_call.1} parent=1 // loop_pre_header
      _
    $region3: #{tpu_custom_call.1} parent=1 // loop_header
      %s27 = sphi 0, %s31
      %p28 = scmp.ge.s32.totalorder %s27, 4
      %s34 = sphi 0, %s46
      %s35 = sphi 0, %s42
      %s36 = sphi 0, %s34
      %s37 = sphi 0, %s35
      %s38 = sphi 0, %s36
      %s39 = sphi 0, %s37
      %s51 = sphi 0, %s53
      %s54 = sphi 0, %s51
      %s55 = sphi 0, %s54
      %s71 = sphi 0, %s55
      %s77 = sphi 0, %s79
      %s80 = sphi 0, %s77
      %s81 = sphi 0, %s80
      %s97 = sphi 0, %s81
      %s103 = sphi 0, %s105
      %s106 = sphi 0, %s103
      %s107 = sphi 0, %s106
      %s123 = sphi 0, %s107
      %s127 = sphi 0, %s127
      %s129 = sphi 0, %s127
      %s130 = sphi 0, %s129
      %s144 = sphi 0, %s130
      %s148 = sphi 0, %s148
      %s150 = sphi 0, %s148
      %s151 = sphi 0, %s150
      %s165 = sphi 0, %s151
      %s169 = sphi 0, %s169
      %s171 = sphi 0, %s169
      %s172 = sphi 0, %s171
      %s186 = sphi 0, %s172
      %s190 = sphi 0, %s190
      %s192 = sphi 0, %s190
      %s193 = sphi 0, %s192
      %s207 = sphi 0, %s193
      %s211 = sphi 0, %s211
      %s213 = sphi 0, %s211
      %s214 = sphi 0, %s213
      %s228 = sphi 0, %s214
      %s232 = sphi 0, %s232
      %s234 = sphi 0, %s232
      %s235 = sphi 0, %s234
      %s249 = sphi 0, %s235
      %s253 = sphi 0, %s253
      %s255 = sphi 0, %s253
      %s256 = sphi 0, %s255
      %s270 = sphi 0, %s256
      %s274 = sphi 0, %s274
      %s276 = sphi 0, %s274
      %s277 = sphi 0, %s276
      %s291 = sphi 0, %s277
      %s299 = sphi 0, %s301
      %s302 = sphi 0, %s299
      %s303 = sphi 0, %s302
      %s319 = sphi 0, %s303
    $region4: #{tpu_custom_call.1} parent=1 // loop_header_branch
      %30 = sbr.rel (%p28) target = $region8
    $region5: #{tpu_custom_call.1} parent=1 // loop_body
      %s32 = ssub.s32 %s27, 1
      %s33 = ssub.s32 %s27, 2
      %s40 = sadd.s32 1, %s35
      %p41 = scmp.ge.s32.totalorder %s40, 1
      %s42 = scalar_select %p41, 0, %s40
      %s43 = sadd.s32 1, %s34
      %s44 = scalar_select %p41, %s43, %s34
      %p45 = scmp.ge.s32.totalorder %s44, 2
      %s46 = scalar_select %p45, 0, %s44
      %s47 = ssub.s32 %s34, %s46
      %s48 = ssub.s32 %s35, %s42
      %s49 = sor.u32 %s47, %s48
      %p50 = scmp.eq.s32.totalorder %s49, 0
      %s52 = sadd.s32 %s51, 1
      %s53 = scalar_select %p50, %s51, %s52
      %p56 = pneg %p50
      %p57 = scmp.eq.s32.totalorder %s27, 1
      %p58 = por %p56, %p57
      %p59 = scmp.ne.s32.totalorder %s51, %s54
      %p60 = scmp.eq.s32.totalorder %s27, 0
      %p61 = por %p59, %p60
      %p62 = scmp.ne.s32.totalorder %s51, %s54
      %p63 = scmp.eq.s32.totalorder %s32, 1
      %p64 = por %p62, %p63
      %p65 = scmp.ne.s32.totalorder %s54, %s55
      %p66 = scmp.eq.s32.totalorder %s32, 0
      %p67 = por %p65, %p66
      %p68 = scmp.ne.s32.totalorder %s54, %s55
      %p69 = scmp.eq.s32.totalorder %s33, 1
      %p70 = por %p68, %p69
      %p72 = scmp.ne.s32.totalorder %s55, %s71
      %p73 = scmp.eq.s32.totalorder %s33, 0
      %p74 = por %p72, %p73
      %s75 = ssub.s32 %s34, %s46
      %p76 = scmp.eq.s32.totalorder %s75, 0
      %s78 = sadd.s32 %s77, 1
      %s79 = scalar_select %p76, %s77, %s78
      %p82 = pneg %p76
      %p83 = scmp.eq.s32.totalorder %s27, 1
      %p84 = por %p82, %p83
      %p85 = scmp.ne.s32.totalorder %s77, %s80
      %p86 = scmp.eq.s32.totalorder %s27, 0
      %p87 = por %p85, %p86
      %p88 = scmp.ne.s32.totalorder %s77, %s80
      %p89 = scmp.eq.s32.totalorder %s32, 1
      %p90 = por %p88, %p89
      %p91 = scmp.ne.s32.totalorder %s80, %s81
      %p92 = scmp.eq.s32.totalorder %s32, 0
      %p93 = por %p91, %p92
      %p94 = scmp.ne.s32.totalorder %s80, %s81
      %p95 = scmp.eq.s32.totalorder %s33, 1
      %p96 = por %p94, %p95
      %p98 = scmp.ne.s32.totalorder %s81, %s97
      %p99 = scmp.eq.s32.totalorder %s33, 0
      %p100 = por %p98, %p99
      %s101 = ssub.s32 %s34, %s46
      %p102 = scmp.eq.s32.totalorder %s101, 0
      %s104 = sadd.s32 %s103, 1
      %s105 = scalar_select %p102, %s103, %s104
      %p108 = pneg %p102
      %p109 = scmp.eq.s32.totalorder %s27, 1
      %p110 = por %p108, %p109
      %p111 = scmp.ne.s32.totalorder %s103, %s106
      %p112 = scmp.eq.s32.totalorder %s27, 0
      %p113 = por %p111, %p112
      %p114 = scmp.ne.s32.totalorder %s103, %s106
      %p115 = scmp.eq.s32.totalorder %s32, 1
      %p116 = por %p114, %p115
      %p117 = scmp.ne.s32.totalorder %s106, %s107
      %p118 = scmp.eq.s32.totalorder %s32, 0
      %p119 = por %p117, %p118
      %p120 = scmp.ne.s32.totalorder %s106, %s107
      %p121 = scmp.eq.s32.totalorder %s33, 1
      %p122 = por %p120, %p121
      %p124 = scmp.ne.s32.totalorder %s107, %s123
      %p125 = scmp.eq.s32.totalorder %s33, 0
      %p126 = por %p124, %p125
      %s128 = sadd.s32 %s127, 1
      %p131 = scmp.eq.s32.totalorder %s27, 1
      %p132 = scmp.ne.s32.totalorder %s127, %s129
      %p133 = scmp.eq.s32.totalorder %s27, 0
      %p134 = por %p132, %p133
      %p135 = scmp.ne.s32.totalorder %s127, %s129
      %p136 = scmp.eq.s32.totalorder %s32, 1
      %p137 = por %p135, %p136
      %p138 = scmp.ne.s32.totalorder %s129, %s130
      %p139 = scmp.eq.s32.totalorder %s32, 0
      %p140 = por %p138, %p139
      %p141 = scmp.ne.s32.totalorder %s129, %s130
      %p142 = scmp.eq.s32.totalorder %s33, 1
      %p143 = por %p141, %p142
      %p145 = scmp.ne.s32.totalorder %s130, %s144
      %p146 = scmp.eq.s32.totalorder %s33, 0
      %p147 = por %p145, %p146
      %s149 = sadd.s32 %s148, 1
      %p152 = scmp.eq.s32.totalorder %s27, 1
      %p153 = scmp.ne.s32.totalorder %s148, %s150
      %p154 = scmp.eq.s32.totalorder %s27, 0
      %p155 = por %p153, %p154
      %p156 = scmp.ne.s32.totalorder %s148, %s150
      %p157 = scmp.eq.s32.totalorder %s32, 1
      %p158 = por %p156, %p157
      %p159 = scmp.ne.s32.totalorder %s150, %s151
      %p160 = scmp.eq.s32.totalorder %s32, 0
      %p161 = por %p159, %p160
      %p162 = scmp.ne.s32.totalorder %s150, %s151
      %p163 = scmp.eq.s32.totalorder %s33, 1
      %p164 = por %p162, %p163
      %p166 = scmp.ne.s32.totalorder %s151, %s165
      %p167 = scmp.eq.s32.totalorder %s33, 0
      %p168 = por %p166, %p167
      %s170 = sadd.s32 %s169, 1
      %p173 = scmp.eq.s32.totalorder %s27, 1
      %p174 = scmp.ne.s32.totalorder %s169, %s171
      %p175 = scmp.eq.s32.totalorder %s27, 0
      %p176 = por %p174, %p175
      %p177 = scmp.ne.s32.totalorder %s169, %s171
      %p178 = scmp.eq.s32.totalorder %s32, 1
      %p179 = por %p177, %p178
      %p180 = scmp.ne.s32.totalorder %s171, %s172
      %p181 = scmp.eq.s32.totalorder %s32, 0
      %p182 = por %p180, %p181
      %p183 = scmp.ne.s32.totalorder %s171, %s172
      %p184 = scmp.eq.s32.totalorder %s33, 1
      %p185 = por %p183, %p184
      %p187 = scmp.ne.s32.totalorder %s172, %s186
      %p188 = scmp.eq.s32.totalorder %s33, 0
      %p189 = por %p187, %p188
      %s191 = sadd.s32 %s190, 1
      %p194 = scmp.eq.s32.totalorder %s27, 1
      %p195 = scmp.ne.s32.totalorder %s190, %s192
      %p196 = scmp.eq.s32.totalorder %s27, 0
      %p197 = por %p195, %p196
      %p198 = scmp.ne.s32.totalorder %s190, %s192
      %p199 = scmp.eq.s32.totalorder %s32, 1
      %p200 = por %p198, %p199
      %p201 = scmp.ne.s32.totalorder %s192, %s193
      %p202 = scmp.eq.s32.totalorder %s32, 0
      %p203 = por %p201, %p202
      %p204 = scmp.ne.s32.totalorder %s192, %s193
      %p205 = scmp.eq.s32.totalorder %s33, 1
      %p206 = por %p204, %p205
      %p208 = scmp.ne.s32.totalorder %s193, %s207
      %p209 = scmp.eq.s32.totalorder %s33, 0
      %p210 = por %p208, %p209
      %s212 = sadd.s32 %s211, 1
      %p215 = scmp.eq.s32.totalorder %s27, 1
      %p216 = scmp.ne.s32.totalorder %s211, %s213
      %p217 = scmp.eq.s32.totalorder %s27, 0
      %p218 = por %p216, %p217
      %p219 = scmp.ne.s32.totalorder %s211, %s213
      %p220 = scmp.eq.s32.totalorder %s32, 1
      %p221 = por %p219, %p220
      %p222 = scmp.ne.s32.totalorder %s213, %s214
      %p223 = scmp.eq.s32.totalorder %s32, 0
      %p224 = por %p222, %p223
      %p225 = scmp.ne.s32.totalorder %s213, %s214
      %p226 = scmp.eq.s32.totalorder %s33, 1
      %p227 = por %p225, %p226
      %p229 = scmp.ne.s32.totalorder %s214, %s228
      %p230 = scmp.eq.s32.totalorder %s33, 0
      %p231 = por %p229, %p230
      %s233 = sadd.s32 %s232, 1
      %p236 = scmp.eq.s32.totalorder %s27, 1
      %p237 = scmp.ne.s32.totalorder %s232, %s234
      %p238 = scmp.eq.s32.totalorder %s27, 0
      %p239 = por %p237, %p238
      %p240 = scmp.ne.s32.totalorder %s232, %s234
      %p241 = scmp.eq.s32.totalorder %s32, 1
      %p242 = por %p240, %p241
      %p243 = scmp.ne.s32.totalorder %s234, %s235
      %p244 = scmp.eq.s32.totalorder %s32, 0
      %p245 = por %p243, %p244
      %p246 = scmp.ne.s32.totalorder %s234, %s235
      %p247 = scmp.eq.s32.totalorder %s33, 1
      %p248 = por %p246, %p247
      %p250 = scmp.ne.s32.totalorder %s235, %s249
      %p251 = scmp.eq.s32.totalorder %s33, 0
      %p252 = por %p250, %p251
      %s254 = sadd.s32 %s253, 1
      %p257 = scmp.eq.s32.totalorder %s27, 1
      %p258 = scmp.ne.s32.totalorder %s253, %s255
      %p259 = scmp.eq.s32.totalorder %s27, 0
      %p260 = por %p258, %p259
      %p261 = scmp.ne.s32.totalorder %s253, %s255
      %p262 = scmp.eq.s32.totalorder %s32, 1
      %p263 = por %p261, %p262
      %p264 = scmp.ne.s32.totalorder %s255, %s256
      %p265 = scmp.eq.s32.totalorder %s32, 0
      %p266 = por %p264, %p265
      %p267 = scmp.ne.s32.totalorder %s255, %s256
      %p268 = scmp.eq.s32.totalorder %s33, 1
      %p269 = por %p267, %p268
      %p271 = scmp.ne.s32.totalorder %s256, %s270
      %p272 = scmp.eq.s32.totalorder %s33, 0
      %p273 = por %p271, %p272
      %s275 = sadd.s32 %s274, 1
      %p278 = scmp.eq.s32.totalorder %s27, 1
      %p279 = scmp.ne.s32.totalorder %s274, %s276
      %p280 = scmp.eq.s32.totalorder %s27, 0
      %p281 = por %p279, %p280
      %p282 = scmp.ne.s32.totalorder %s274, %s276
      %p283 = scmp.eq.s32.totalorder %s32, 1
      %p284 = por %p282, %p283
      %p285 = scmp.ne.s32.totalorder %s276, %s277
      %p286 = scmp.eq.s32.totalorder %s32, 0
      %p287 = por %p285, %p286
      %p288 = scmp.ne.s32.totalorder %s276, %s277
      %p289 = scmp.eq.s32.totalorder %s33, 1
      %p290 = por %p288, %p289
      %p292 = scmp.ne.s32.totalorder %s277, %s291
      %p293 = scmp.eq.s32.totalorder %s33, 0
      %p294 = por %p292, %p293
      %s295 = ssub.s32 %s34, %s46
      %s296 = ssub.s32 %s35, %s42
      %s297 = sor.u32 %s295, %s296
      %p298 = scmp.eq.s32.totalorder %s297, 0
      %s300 = sadd.s32 %s299, 1
      %s301 = scalar_select %p298, %s299, %s300
      %p304 = pneg %p298
      %p305 = scmp.eq.s32.totalorder %s27, 1
      %p306 = por %p304, %p305
      %p307 = scmp.ne.s32.totalorder %s299, %s302
      %p308 = scmp.eq.s32.totalorder %s27, 0
      %p309 = por %p307, %p308
      %p310 = scmp.ne.s32.totalorder %s299, %s302
      %p311 = scmp.eq.s32.totalorder %s32, 1
      %p312 = por %p310, %p311
      %p313 = scmp.ne.s32.totalorder %s302, %s303
      %p314 = scmp.eq.s32.totalorder %s32, 0
      %p315 = por %p313, %p314
      %p316 = scmp.ne.s32.totalorder %s302, %s303
      %p317 = scmp.eq.s32.totalorder %s33, 1
      %p318 = por %p316, %p317
      %p320 = scmp.ne.s32.totalorder %s303, %s319
      %p321 = scmp.eq.s32.totalorder %s33, 0
      %p322 = por %p320, %p321
      %p323 = scmp.le.s32.totalorder 1, %s27
      %p324 = scmp.lt.s32.totalorder %s27, 3
      %p325 = pnand %p323, %p324
      %p326 = pneg %p325
      // Predicated region
      $region9: #{tpu_custom_call.1} parent=5 // pred_check
        _
      $region10: #{tpu_custom_call.1} parent=5 // pred_check_branch
        %328 = sbr.rel (%p325) target = $region12
      $region11: #{tpu_custom_call.1} parent=5 // pred_region
        %s329 = ssub.s32 %s27, 1
        // Predicated region
        $region13: #{tpu_custom_call.1} parent=11 // pred_check
          %p330 = pneg %p140
        $region14: #{tpu_custom_call.1} parent=11 // pred_check_branch
          %332 = sbr.rel (%p330) target = $region16
        $region15: #{tpu_custom_call.1} parent=11 // pred_region
          %s334 = ssub.s32 256, 256
          %335 = vsyncadd [#allocation10], %s334
          %s336 = sshll.u32 [#allocation11], 4
          %s337 = int_to_ptr.vmem [resolvable:$true] %s336
          %342 = dma.hbm_to_vmem [thread:$0]  %s3, 256, %s337, [#allocation10], 64, 64, 4
        $region16: #{tpu_custom_call.1} parent=11 // pred_fallthru
          _
        // Predicated region
        $region17: #{tpu_custom_call.1} parent=11 // pred_check
          %p343 = pneg %p161
        $region18: #{tpu_custom_call.1} parent=11 // pred_check_branch
          %345 = sbr.rel (%p343) target = $region20
        $region19: #{tpu_custom_call.1} parent=11 // pred_region
          %s347 = ssub.s32 16, 16
          %348 = vsyncadd [#allocation13], %s347
          %s350 = sshll.u32 [#allocation12], 4
          %s351 = int_to_ptr.vmem [resolvable:$true] %s350
          %353 = dma.hbm_to_vmem [thread:$0]  %s4, 16, %s351, [#allocation13]
        $region20: #{tpu_custom_call.1} parent=11 // pred_fallthru
          _
        // Predicated region
        $region21: #{tpu_custom_call.1} parent=11 // pred_check
          %p354 = pneg %p182
        $region22: #{tpu_custom_call.1} parent=11 // pred_check_branch
          %356 = sbr.rel (%p354) target = $region24
        $region23: #{tpu_custom_call.1} parent=11 // pred_region
          _
        $region24: #{tpu_custom_call.1} parent=11 // pred_fallthru
          _
        // Predicated region
        $region25: #{tpu_custom_call.1} parent=11 // pred_check
          %p357 = pneg %p203
        $region26: #{tpu_custom_call.1} parent=11 // pred_check_branch
          %359 = sbr.rel (%p357) target = $region28
        $region27: #{tpu_custom_call.1} parent=11 // pred_region
          _
        $region28: #{tpu_custom_call.1} parent=11 // pred_fallthru
          _
        // Predicated region
        $region29: #{tpu_custom_call.1} parent=11 // pred_check
          %p360 = pneg %p224
        $region30: #{tpu_custom_call.1} parent=11 // pred_check_branch
          %362 = sbr.rel (%p360) target = $region32
        $region31: #{tpu_custom_call.1} parent=11 // pred_region
          %s364 = ssub.s32 256, 256
          %365 = vsyncadd [#allocation13], %s364
          %s366 = sshll.u32 [#allocation14], 4
          %s367 = int_to_ptr.vmem [resolvable:$true] %s366
          %372 = dma.hbm_to_vmem [thread:$0]  %s7, 256, %s367, [#allocation13], 64, 64, 4
        $region32: #{tpu_custom_call.1} parent=11 // pred_fallthru
          _
        // Predicated region
        $region33: #{tpu_custom_call.1} parent=11 // pred_check
          %p373 = pneg %p245
        $region34: #{tpu_custom_call.1} parent=11 // pred_check_branch
          %375 = sbr.rel (%p373) target = $region36
        $region35: #{tpu_custom_call.1} parent=11 // pred_region
          _
        $region36: #{tpu_custom_call.1} parent=11 // pred_fallthru
          _
        // Predicated region
        $region37: #{tpu_custom_call.1} parent=11 // pred_check
          %p376 = pneg %p266
        $region38: #{tpu_custom_call.1} parent=11 // pred_check_branch
          %378 = sbr.rel (%p376) target = $region40
        $region39: #{tpu_custom_call.1} parent=11 // pred_region
          _
        $region40: #{tpu_custom_call.1} parent=11 // pred_fallthru
          _
        // Predicated region
        $region41: #{tpu_custom_call.1} parent=11 // pred_check
          %p379 = pneg %p287
        $region42: #{tpu_custom_call.1} parent=11 // pred_check_branch
          %381 = sbr.rel (%p379) target = $region44
        $region43: #{tpu_custom_call.1} parent=11 // pred_region
          _
        $region44: #{tpu_custom_call.1} parent=11 // pred_fallthru
          _
      $region12: #{tpu_custom_call.1} parent=5 // pred_fallthru
        _
      %p382 = scmp.lt.s32.totalorder %s27, 2
      // Predicated region
      $region45: #{tpu_custom_call.1} parent=5 // pred_check
        %p383 = pneg %p382
      $region46: #{tpu_custom_call.1} parent=5 // pred_check_branch
        %385 = sbr.rel (%p383) target = $region48
      $region47: #{tpu_custom_call.1} parent=5 // pred_region
        // Predicated region
        $region49: #{tpu_custom_call.1} parent=47 // pred_check
          %p386 = pneg %p61
        $region50: #{tpu_custom_call.1} parent=47 // pred_check_branch
          %388 = sbr.rel (%p386) target = $region52
        $region51: #{tpu_custom_call.1} parent=47 // pred_region
          %s389 = sand.u32 %s51, 1
          %s390 = scalar_lea.sflag [#allocation7], %s389
          %s391 = sand.u32 %s51, 1
          %s392 = smul.addr %s391, 8
          %s393 = scalar_lea.vmem [#allocation6], %s392
          %s395 = ssub.s32 128, 128
          %396 = vsyncadd %s390, %s395
          %s397 = sadd.s32 %s35, %s34
          %s398 = smul.addr %s397, 128
          %s399 = scalar_lea.hbm %s0, %s398
          %s401 = sshll.u32 %s393, 4
          %s402 = int_to_ptr.vmem [resolvable:$true] %s401
          %404 = dma.hbm_to_vmem [thread:$0]  %s399, 128, %s402, %s390
        $region52: #{tpu_custom_call.1} parent=47 // pred_fallthru
          _
        // Predicated region
        $region53: #{tpu_custom_call.1} parent=47 // pred_check
          %p405 = pneg %p87
        $region54: #{tpu_custom_call.1} parent=47 // pred_check_branch
          %407 = sbr.rel (%p405) target = $region56
        $region55: #{tpu_custom_call.1} parent=47 // pred_region
          %s408 = sand.u32 %s27, 1
          %s409 = scalar_lea.sflag [#allocation10], %s408
          %s410 = sand.u32 %s77, 1
          %s411 = smul.addr %s410, 4
          %s412 = scalar_lea.vmem [#allocation9], %s411
          %s414 = ssub.s32 64, 64
          %415 = vsyncadd %s409, %s414
          %s416 = smul.addr %s34, 64
          %s417 = scalar_lea.hbm %s1, %s416
          %s419 = sshll.u32 %s412, 4
          %s420 = int_to_ptr.vmem [resolvable:$true] %s419
          %422 = dma.hbm_to_vmem [thread:$0]  %s417, 64, %s420, %s409
        $region56: #{tpu_custom_call.1} parent=47 // pred_fallthru
          _
        // Predicated region
        $region57: #{tpu_custom_call.1} parent=47 // pred_check
          %p423 = pneg %p113
        $region58: #{tpu_custom_call.1} parent=47 // pred_check_branch
          %425 = sbr.rel (%p423) target = $region60
        $region59: #{tpu_custom_call.1} parent=47 // pred_region
          %p426 = scmp.lt.s32.totalorder %s34, 1
          %s427 = scalar_select %p426, %s34, 1
          %s428 = scalar_lea.vmem %s2, %s427
        $region60: #{tpu_custom_call.1} parent=47 // pred_fallthru
          _
      $region48: #{tpu_custom_call.1} parent=5 // pred_fallthru
        _
      %p429 = scmp.le.s32.totalorder 1, %s27
      %p430 = scmp.lt.s32.totalorder %s27, 3
      %p431 = pnand %p429, %p430
      %p432 = pneg %p431
      // Predicated region
      $region61: #{tpu_custom_call.1} parent=5 // pred_check
        _
      $region62: #{tpu_custom_call.1} parent=5 // pred_check_branch
        %434 = sbr.rel (%p431) target = $region64
      $region63: #{tpu_custom_call.1} parent=5 // pred_region
        %s435 = ssub.s32 %s27, 1
        %s436 = sand.u32 %s54, 1
        %s437 = scalar_lea.sflag [#allocation7], %s436
        %s438 = sand.u32 %s54, 1
        %s439 = smul.addr %s438, 8
        %s440 = scalar_lea.vmem [#allocation6], %s439
        // Predicated region
        $region65: #{tpu_custom_call.1} parent=63 // pred_check
          %p441 = pneg %p67
        $region66: #{tpu_custom_call.1} parent=63 // pred_check_branch
          %443 = sbr.rel (%p441) target = $region68
        $region67: #{tpu_custom_call.1} parent=63 // pred_region
          %444 = dma.done %s437, 128
        $region68: #{tpu_custom_call.1} parent=63 // pred_fallthru
          _
        %s445 = sand.u32 %s32, 1
        %s446 = scalar_lea.sflag [#allocation10], %s445
        %s447 = sand.u32 %s80, 1
        %s448 = smul.addr %s447, 4
        %s449 = scalar_lea.vmem [#allocation9], %s448
        // Predicated region
        $region69: #{tpu_custom_call.1} parent=63 // pred_check
          %p450 = pneg %p93
        $region70: #{tpu_custom_call.1} parent=63 // pred_check_branch
          %452 = sbr.rel (%p450) target = $region72
        $region71: #{tpu_custom_call.1} parent=63 // pred_region
          %453 = dma.done %s446, 64
        $region72: #{tpu_custom_call.1} parent=63 // pred_fallthru
          _
        // Predicated region
        $region73: #{tpu_custom_call.1} parent=63 // pred_check
          %p454 = pneg %p140
        $region74: #{tpu_custom_call.1} parent=63 // pred_check_branch
          %456 = sbr.rel (%p454) target = $region76
        $region75: #{tpu_custom_call.1} parent=63 // pred_region
          %457 = dma.done [#allocation10], 256
        $region76: #{tpu_custom_call.1} parent=63 // pred_fallthru
          _
        // Predicated region
        $region77: #{tpu_custom_call.1} parent=63 // pred_check
          %p458 = pneg %p161
        $region78: #{tpu_custom_call.1} parent=63 // pred_check_branch
          %460 = sbr.rel (%p458) target = $region80
        $region79: #{tpu_custom_call.1} parent=63 // pred_region
          %461 = dma.done [#allocation13], 16
        $region80: #{tpu_custom_call.1} parent=63 // pred_fallthru
          _
        // Predicated region
        $region81: #{tpu_custom_call.1} parent=63 // pred_check
          %p462 = pneg %p224
        $region82: #{tpu_custom_call.1} parent=63 // pred_check_branch
          %464 = sbr.rel (%p462) target = $region84
        $region83: #{tpu_custom_call.1} parent=63 // pred_region
          %465 = dma.done [#allocation13], 256
        $region84: #{tpu_custom_call.1} parent=63 // pred_fallthru
          _
        %s466 = sand.u32 %s54, 1
        %s467 = scalar_lea.sflag [#allocation7], %s466
        %s468 = sand.u32 %s54, 1
        %s469 = smul.addr %s468, 8
        %s470 = scalar_lea.vmem [#allocation6], %s469
        %p471 = pneg %p67
        %p472 = pneg %p64
        %s473 = sand.u32 %s32, 1
        %s474 = scalar_lea.sflag [#allocation10], %s473
        %s475 = sand.u32 %s80, 1
        %s476 = smul.addr %s475, 4
        %s477 = scalar_lea.vmem [#allocation9], %s476
        %p478 = pneg %p93
        %p479 = pneg %p90
        %p480 = scmp.lt.s32.totalorder %s36, 1
        %s481 = scalar_select %p480, %s36, 1
        %s482 = scalar_lea.vmem %s2, %s481
        %p483 = pneg %p119
        %p484 = pneg %p116
        %p485 = pneg %p140
        %p486 = pneg %p137
        %p487 = pneg %p161
        %p488 = pneg %p158
        %p489 = pneg %p182
        %p490 = pneg %p179
        %p491 = pneg %p203
        %p492 = pneg %p200
        %p493 = pneg %p224
        %p494 = pneg %p221
        %p495 = pneg %p245
        %p496 = pneg %p242
        %p497 = pneg %p266
        %p498 = pneg %p263
        %p499 = pneg %p287
        %p500 = pneg %p284
        %p501 = pneg %p315
        %p502 = pneg %p312
        %s503 = sand.u32 %s302, 1
        %s504 = scalar_lea.sflag [#allocation8], %s503
        %s505 = sand.u32 %s302, 1
        %s506 = smul.addr %s505, 8
        %s507 = scalar_lea.vmem [#allocation15], %s506
        %p508 = scmp.lt.s32.totalorder %s36, 1
        %s509 = scalar_select %p508, %s36, 1
        %s510 = scalar_lea.vmem %s2, %s509
        %p512 = scmp.eq.s32.totalorder %s37, 0
        // Predicated region
        $region85: #{tpu_custom_call.1} parent=63 // pred_check
          %p513 = pneg %p512
        $region86: #{tpu_custom_call.1} parent=63 // pred_check_branch
          %515 = sbr.rel (%p513) target = $region88
        $region87: #{tpu_custom_call.1} parent=63 // pred_region
          %v516 = vld [vmem:[%s449] sm:$0xf]
          %v517 = vld [vmem:[%s5] sm:$0xf]
          %v518 = vld [vmem:[%s5 + $0x4] sm:$0xf]
          %v519 = vld [vmem:[%s5 + $0x8] sm:$0xf]
          %v520 = vld [vmem:[%s5 + $0xc] sm:$0xf]
          %v521 = vld [vmem:[%s6] sm:$0x1]
          %v523 = vlaneseq
          %v524 = vshrl.u32 %v523, 7
          %v525 = vsub.s32 0, %v524
          %v526 = vrot.slane %v521, %v525
          %v532 = vunpack.c.l.b16 %v517
          %v533 = vunpack.c.l.b16 %v518
          %v534 = vunpack.c.l.b16 %v519
          %v535 = vunpack.c.l.b16 %v520
          %v536 = vpack.c.b16 %v533, %v532
          %v537 = vpack.c.b16 %v535, %v534
          %vm540 = vcmask 261120
          %v542 = vsel %vm540, %v516, 0
          %544 = vmatprep.subr.bf16.mxu0 0
          %545 = vmatpush1.bf16.msra.mxu0 %v536
          %546 = vmatprep.subr.bf16.mxu0 0
          %547 = vmatpush1.bf16.msra.mxu0 %v537
          %548 = vmatprep.subr.bf16.mxu0 0
          %549 = vmatpush1.bf16.msra.mxu0 0
          %550 = vmatprep.subr.bf16.mxu0 0
          %551 = vmatpush1.bf16.msra.mxu0 0
          %552 = vmatprep.subr.bf16.mxu0 0
          %553 = vmatpush1.bf16.msra.mxu0 0
          %554 = vmatprep.subr.bf16.mxu0 0
          %555 = vmatpush1.bf16.msra.mxu0 0
          %556 = vmatprep.subr.bf16.mxu0 0
          %557 = vmatpush1.bf16.msra.mxu0 0
          %558 = vmatprep.subr.bf16.mxu0 0
          %559 = vmatpush1.bf16.msra.mxu0 0
          %560 = vmatprep.subr.bf16.mxu0 0
          %561 = vmatpush1.bf16.msra.mxu0 0
          %562 = vmatprep.subr.bf16.mxu0 0
          %563 = vmatpush1.bf16.msra.mxu0 0
          %564 = vmatprep.subr.bf16.mxu0 0
          %565 = vmatpush1.bf16.msra.mxu0 0
          %566 = vmatprep.subr.bf16.mxu0 0
          %567 = vmatpush1.bf16.msra.mxu0 0
          %568 = vmatprep.subr.bf16.mxu0 0
          %569 = vmatpush1.bf16.msra.mxu0 0
          %570 = vmatprep.subr.bf16.mxu0 0
          %571 = vmatpush1.bf16.msra.mxu0 0
          %572 = vmatprep.subr.bf16.mxu0 0
          %573 = vmatpush1.bf16.msra.mxu0 0
          %574 = vmatprep.subr.bf16.mxu0 0
          %575 = vmatpush1.bf16.msra.mxu0 0
          %576 = vmatprep.mubr.bf16.mxu0 0
          %577 = vmatmul.mubr.bf16.gmra.mrb[0].mxu0 %v542
          %v578 = vpop.f32.mrb[0].mxu0
          %v579 = vadd.f32 %v526, %v578
          %v580 = vpop.f32.mrb[0].mxu0
          %v581 = vpop.f32.mrb[0].mxu0
          %v582 = vpop.f32.mrb[0].mxu0
          %583 = vdwg.mxu0
          %v584 = vpack.c.bf16 %v579, %v579
          %vm585 = vcmask 257024
          %586 = vst.msk [vmem:[#allocation2] sm:$0xf] %vm585, %v584
          %v588 = vunpack.c.l.b16 %v584
          %v589 = vpack.c.b16 %v588, %v588
          %590 = vrot.lane.b32.xlu0 %v589, 96
          %v591 = vpop.permute.xlu0 %590
          %593 = vst.msk [vmem:[#allocation3] sm:$0xf] %vm585, %v591
        $region88: #{tpu_custom_call.1} parent=63 // pred_fallthru
          _
        %v594 = vld [vmem:[%s440] sm:$0xff]
        %v595 = vpack.c.bf16 %v594, %v594
        %v596 = vld [vmem:[#allocation11] sm:$0xf]
        %v597 = vld [vmem:[#allocation11 + $0x4] sm:$0xf]
        %v598 = vld [vmem:[#allocation11 + $0x8] sm:$0xf]
        %v599 = vld [vmem:[#allocation11 + $0xc] sm:$0xf]
        %v600 = vld [vmem:[#allocation12] sm:$0x1]
        %v602 = vlaneseq
        %v603 = vshrl.u32 %v602, 7
        %v604 = vsub.s32 0, %v603
        %v605 = vrot.slane %v600, %v604
        %v611 = vunpack.c.l.b16 %v596
        %v612 = vunpack.c.l.b16 %v597
        %v613 = vunpack.c.l.b16 %v598
        %v614 = vunpack.c.l.b16 %v599
        %v615 = vpack.c.b16 %v612, %v611
        %v616 = vpack.c.b16 %v614, %v613
        %vm619 = vcmask 261120
        %v621 = vsel %vm619, %v595, 0
        %623 = vmatprep.subr.bf16.mxu0 0
        %624 = vmatpush1.bf16.msra.mxu0 %v615
        %625 = vmatprep.subr.bf16.mxu0 0
        %626 = vmatpush1.bf16.msra.mxu0 %v616
        %627 = vmatprep.subr.bf16.mxu0 0
        %628 = vmatpush1.bf16.msra.mxu0 0
        %629 = vmatprep.subr.bf16.mxu0 0
        %630 = vmatpush1.bf16.msra.mxu0 0
        %631 = vmatprep.subr.bf16.mxu0 0
        %632 = vmatpush1.bf16.msra.mxu0 0
        %633 = vmatprep.subr.bf16.mxu0 0
        %634 = vmatpush1.bf16.msra.mxu0 0
        %635 = vmatprep.subr.bf16.mxu0 0
        %636 = vmatpush1.bf16.msra.mxu0 0
        %637 = vmatprep.subr.bf16.mxu0 0
        %638 = vmatpush1.bf16.msra.mxu0 0
        %639 = vmatprep.subr.bf16.mxu0 0
        %640 = vmatpush1.bf16.msra.mxu0 0
        %641 = vmatprep.subr.bf16.mxu0 0
        %642 = vmatpush1.bf16.msra.mxu0 0
        %643 = vmatprep.subr.bf16.mxu0 0
        %644 = vmatpush1.bf16.msra.mxu0 0
        %645 = vmatprep.subr.bf16.mxu0 0
        %646 = vmatpush1.bf16.msra.mxu0 0
        %647 = vmatprep.subr.bf16.mxu0 0
        %648 = vmatpush1.bf16.msra.mxu0 0
        %649 = vmatprep.subr.bf16.mxu0 0
        %650 = vmatpush1.bf16.msra.mxu0 0
        %651 = vmatprep.subr.bf16.mxu0 0
        %652 = vmatpush1.bf16.msra.mxu0 0
        %653 = vmatprep.subr.bf16.mxu0 0
        %654 = vmatpush1.bf16.msra.mxu0 0
        %655 = vmatprep.mubr.bf16.mxu0 0
        %656 = vmatmul.mubr.bf16.gmra.mrb[0].mxu0 %v621
        %v657 = vpop.f32.mrb[0].mxu0
        %v658 = vadd.f32 %v605, %v657
        %v659 = vpop.f32.mrb[0].mxu0
        %v660 = vpop.f32.mrb[0].mxu0
        %v661 = vpop.f32.mrb[0].mxu0
        %662 = vdwg.mxu0
        %v663 = vpack.c.bf16 %v658, %v658
        %vm664 = vcmask 257024
        %665 = vst.msk [vmem:[#allocation4] sm:$0xf] %vm664, %v663
        %v666 = vld [vmem:[%s510] sm:$0x1]
        %v668 = vlaneseq
        %v669 = vshrl.u32 %v668, 7
        %v670 = vsub.s32 0, %v669
        %v671 = vrot.slane %v666, %v670
        %v673 = vld [vmem:[%s8] sm:$0x1]
        %v675 = vlaneseq
        %v676 = vshrl.u32 %v675, 7
        %v677 = vsub.s32 0, %v676
        %v678 = vrot.slane %v673, %v677
        %v680 = vadd.f32 %v594, %v678
        %681 = vst.msk [vmem:[#allocation5] sm:$0xff] %vm619, %v680
        %v682 = vld [vmem:[#allocation4] sm:$0xf]
        %v683 = vld [vmem:[#allocation2] sm:$0xf]
        %v684 = vld [vmem:[#allocation3] sm:$0xf]
        %vm685 = vcmask 64512
        %v687 = vsel %vm685, %v682, 0
        %v690 = vsel %vm685, %v683, 0
        %692 = vmatprep.subr.bf16.mxu0 0
        %693 = vmatpush1.bf16.xpose.msra.mxu0 %v690
        %694 = vmatprep.subr.bf16.mxu0 0
        %695 = vmatpush1.bf16.xpose.msra.mxu0 0
        %696 = vmatprep.subr.bf16.mxu0 0
        %697 = vmatpush1.bf16.xpose.msra.mxu0 0
        %698 = vmatprep.subr.bf16.mxu0 0
        %699 = vmatpush1.bf16.xpose.msra.mxu0 0
        %700 = vmatprep.subr.bf16.mxu0 0
        %701 = vmatpush1.bf16.xpose.msra.mxu0 0
        %702 = vmatprep.subr.bf16.mxu0 0
        %703 = vmatpush1.bf16.xpose.msra.mxu0 0
        %704 = vmatprep.subr.bf16.mxu0 0
        %705 = vmatpush1.bf16.xpose.msra.mxu0 0
        %706 = vmatprep.subr.bf16.mxu0 0
        %707 = vmatpush1.bf16.xpose.msra.mxu0 0
        %708 = vmatprep.subr.bf16.mxu0 0
        %709 = vmatpush1.bf16.xpose.msra.mxu0 0
        %710 = vmatprep.subr.bf16.mxu0 0
        %711 = vmatpush1.bf16.xpose.msra.mxu0 0
        %712 = vmatprep.subr.bf16.mxu0 0
        %713 = vmatpush1.bf16.xpose.msra.mxu0 0
        %714 = vmatprep.subr.bf16.mxu0 0
        %715 = vmatpush1.bf16.xpose.msra.mxu0 0
        %716 = vmatprep.subr.bf16.mxu0 0
        %717 = vmatpush1.bf16.xpose.msra.mxu0 0
        %718 = vmatprep.subr.bf16.mxu0 0
        %719 = vmatpush1.bf16.xpose.msra.mxu0 0
        %720 = vmatprep.subr.bf16.mxu0 0
        %721 = vmatpush1.bf16.xpose.msra.mxu0 0
        %722 = vmatprep.subr.bf16.mxu0 0
        %723 = vmatpush1.bf16.xpose.msra.mxu0 0
        %724 = vmatprep.mubr.bf16.mxu0 0
        %725 = vmatmul.mubr.bf16.gmra.mrb[0].mxu0 %v687
        %v726 = vpop.f32.mrb[0].mxu0
        %v727 = vadd.f32 %v671, %v726
        %v728 = vpop.f32.mrb[0].mxu0
        %v729 = vpop.f32.mrb[0].mxu0
        %v730 = vpop.f32.mrb[0].mxu0
        %731 = vdwg.mxu0
        %v732 = vsel %vm685, %v727, -inf
        %733 = vmax.xlane.f32.xlu0 %v732
        %v734 = vpop.xlane.xlu0 %733
        %v735 = vsub.f32 %v727, %v734
        %v736 = vmul.f32 %v735, 1.442695
        %v737 = vpow.pop %v736
        %v738 = vsel %vm685, %v737, 0.0
        %739 = vadd.xlane.f32.xlu0 %v738
        %v740 = vpop.xlane.xlu0 %739
        %v741 = vrcp.pop %v740
        %v742 = vmul.f32 %v737, %v741
        %v743 = vpack.c.bf16 %v742, %v742
        %v745 = vsel %vm685, %v743, 0
        %vm747 = vcmask 1043456
        %v749 = vsel %vm747, %v684, 0
        %751 = vmatprep.subr.bf16.mxu0 0
        %752 = vmatpush1.bf16.msra.mxu0 %v749
        %753 = vmatprep.subr.bf16.mxu0 0
        %754 = vmatpush1.bf16.msra.mxu0 0
        %755 = vmatprep.subr.bf16.mxu0 0
        %756 = vmatpush1.bf16.msra.mxu0 0
        %757 = vmatprep.subr.bf16.mxu0 0
        %758 = vmatpush1.bf16.msra.mxu0 0
        %759 = vmatprep.subr.bf16.mxu0 0
        %760 = vmatpush1.bf16.msra.mxu0 0
        %761 = vmatprep.subr.bf16.mxu0 0
        %762 = vmatpush1.bf16.msra.mxu0 0
        %763 = vmatprep.subr.bf16.mxu0 0
        %764 = vmatpush1.bf16.msra.mxu0 0
        %765 = vmatprep.subr.bf16.mxu0 0
        %766 = vmatpush1.bf16.msra.mxu0 0
        %767 = vmatprep.subr.bf16.mxu0 0
        %768 = vmatpush1.bf16.msra.mxu0 0
        %769 = vmatprep.subr.bf16.mxu0 0
        %770 = vmatpush1.bf16.msra.mxu0 0
        %771 = vmatprep.subr.bf16.mxu0 0
        %772 = vmatpush1.bf16.msra.mxu0 0
        %773 = vmatprep.subr.bf16.mxu0 0
        %774 = vmatpush1.bf16.msra.mxu0 0
        %775 = vmatprep.subr.bf16.mxu0 0
        %776 = vmatpush1.bf16.msra.mxu0 0
        %777 = vmatprep.subr.bf16.mxu0 0
        %778 = vmatpush1.bf16.msra.mxu0 0
        %779 = vmatprep.subr.bf16.mxu0 0
        %780 = vmatpush1.bf16.msra.mxu0 0
        %781 = vmatprep.subr.bf16.mxu0 0
        %782 = vmatpush1.bf16.msra.mxu0 0
        %783 = vmatprep.mubr.bf16.mxu0 0
        %784 = vmatmul.mubr.bf16.gmra.mrb[0].mxu0 %v745
        %v785 = vpop.f32.mrb[0].mxu0
        %v786 = vadd.f32 0.0, %v785
        %v787 = vpop.f32.mrb[0].mxu0
        %v788 = vpop.f32.mrb[0].mxu0
        %v789 = vpop.f32.mrb[0].mxu0
        %790 = vdwg.mxu0
        %v792 = vunpack.c.l.b16 %v682
        %v793 = vpack.c.b16 %v792, %v792
        %794 = vrot.lane.b32.xlu0 %v793, 120
        %v795 = vpop.permute.xlu0 %794
        %v797 = vunpack.c.l.b16 %v683
        %v798 = vpack.c.b16 %v797, %v797
        %799 = vrot.lane.b32.xlu0 %v798, 120
        %v800 = vpop.permute.xlu0 %799
        %v802 = vsel %vm685, %v795, 0
        %v805 = vsel %vm685, %v800, 0
        %807 = vmatprep.subr.bf16.mxu0 0
        %808 = vmatpush1.bf16.xpose.msra.mxu0 %v805
        %809 = vmatprep.subr.bf16.mxu0 0
        %810 = vmatpush1.bf16.xpose.msra.mxu0 0
        %811 = vmatprep.subr.bf16.mxu0 0
        %812 = vmatpush1.bf16.xpose.msra.mxu0 0
        %813 = vmatprep.subr.bf16.mxu0 0
        %814 = vmatpush1.bf16.xpose.msra.mxu0 0
        %815 = vmatprep.subr.bf16.mxu0 0
        %816 = vmatpush1.bf16.xpose.msra.mxu0 0
        %817 = vmatprep.subr.bf16.mxu0 0
        %818 = vmatpush1.bf16.xpose.msra.mxu0 0
        %819 = vmatprep.subr.bf16.mxu0 0
        %820 = vmatpush1.bf16.xpose.msra.mxu0 0
        %821 = vmatprep.subr.bf16.mxu0 0
        %822 = vmatpush1.bf16.xpose.msra.mxu0 0
        %823 = vmatprep.subr.bf16.mxu0 0
        %824 = vmatpush1.bf16.xpose.msra.mxu0 0
        %825 = vmatprep.subr.bf16.mxu0 0
        %826 = vmatpush1.bf16.xpose.msra.mxu0 0
        %827 = vmatprep.subr.bf16.mxu0 0
        %828 = vmatpush1.bf16.xpose.msra.mxu0 0
        %829 = vmatprep.subr.bf16.mxu0 0
        %830 = vmatpush1.bf16.xpose.msra.mxu0 0
        %831 = vmatprep.subr.bf16.mxu0 0
        %832 = vmatpush1.bf16.xpose.msra.mxu0 0
        %833 = vmatprep.subr.bf16.mxu0 0
        %834 = vmatpush1.bf16.xpose.msra.mxu0 0
        %835 = vmatprep.subr.bf16.mxu0 0
        %836 = vmatpush1.bf16.xpose.msra.mxu0 0
        %837 = vmatprep.subr.bf16.mxu0 0
        %838 = vmatpush1.bf16.xpose.msra.mxu0 0
        %839 = vmatprep.mubr.bf16.mxu0 0
        %840 = vmatmul.mubr.bf16.gmra.mrb[0].mxu0 %v802
        %v841 = vpop.f32.mrb[0].mxu0
        %v842 = vadd.f32 %v671, %v841
        %v843 = vpop.f32.mrb[0].mxu0
        %v844 = vpop.f32.mrb[0].mxu0
        %v845 = vpop.f32.mrb[0].mxu0
        %846 = vdwg.mxu0
        %v847 = vsel %vm685, %v842, -inf
        %848 = vmax.xlane.f32.xlu0 %v847
        %v849 = vpop.xlane.xlu0 %848
        %v850 = vsub.f32 %v842, %v849
        %v851 = vmul.f32 %v850, 1.442695
        %v852 = vpow.pop %v851
        %v853 = vsel %vm685, %v852, 0.0
        %854 = vadd.xlane.f32.xlu0 %v853
        %v855 = vpop.xlane.xlu0 %854
        %v856 = vrcp.pop %v855
        %v857 = vmul.f32 %v852, %v856
        %v858 = vpack.c.bf16 %v857, %v857
        %v860 = vunpack.c.l.b16 %v684
        %v861 = vpack.c.b16 %v860, %v860
        %862 = vrot.lane.b32.xlu0 %v861, 120
        %v863 = vpop.permute.xlu0 %862
        %v865 = vsel %vm685, %v858, 0
        %v868 = vsel %vm747, %v863, 0
        %870 = vmatprep.subr.bf16.mxu0 0
        %871 = vmatpush1.bf16.msra.mxu0 %v868
        %872 = vmatprep.subr.bf16.mxu0 0
        %873 = vmatpush1.bf16.msra.mxu0 0
        %874 = vmatprep.subr.bf16.mxu0 0
        %875 = vmatpush1.bf16.msra.mxu0 0
        %876 = vmatprep.subr.bf16.mxu0 0
        %877 = vmatpush1.bf16.msra.mxu0 0
        %878 = vmatprep.subr.bf16.mxu0 0
        %879 = vmatpush1.bf16.msra.mxu0 0
        %880 = vmatprep.subr.bf16.mxu0 0
        %881 = vmatpush1.bf16.msra.mxu0 0
        %882 = vmatprep.subr.bf16.mxu0 0
        %883 = vmatpush1.bf16.msra.mxu0 0
        %884 = vmatprep.subr.bf16.mxu0 0
        %885 = vmatpush1.bf16.msra.mxu0 0
        %886 = vmatprep.subr.bf16.mxu0 0
        %887 = vmatpush1.bf16.msra.mxu0 0
        %888 = vmatprep.subr.bf16.mxu0 0
        %889 = vmatpush1.bf16.msra.mxu0 0
        %890 = vmatprep.subr.bf16.mxu0 0
        %891 = vmatpush1.bf16.msra.mxu0 0
        %892 = vmatprep.subr.bf16.mxu0 0
        %893 = vmatpush1.bf16.msra.mxu0 0
        %894 = vmatprep.subr.bf16.mxu0 0
        %895 = vmatpush1.bf16.msra.mxu0 0
        %896 = vmatprep.subr.bf16.mxu0 0
        %897 = vmatpush1.bf16.msra.mxu0 0
        %898 = vmatprep.subr.bf16.mxu0 0
        %899 = vmatpush1.bf16.msra.mxu0 0
        %900 = vmatprep.subr.bf16.mxu0 0
        %901 = vmatpush1.bf16.msra.mxu0 0
        %902 = vmatprep.mubr.bf16.mxu0 0
        %903 = vmatmul.mubr.bf16.gmra.mrb[0].mxu0 %v865
        %v904 = vpop.f32.mrb[0].mxu0
        %v905 = vadd.f32 0.0, %v904
        %v906 = vpop.f32.mrb[0].mxu0
        %v907 = vpop.f32.mrb[0].mxu0
        %v908 = vpop.f32.mrb[0].mxu0
        %909 = vdwg.mxu0
        %910 = vrot.lane.b32.xlu0 %v793, 112
        %v911 = vpop.permute.xlu0 %910
        %912 = vrot.lane.b32.xlu0 %v798, 112
        %v913 = vpop.permute.xlu0 %912
        %v915 = vsel %vm685, %v911, 0
        %v918 = vsel %vm685, %v913, 0
        %920 = vmatprep.subr.bf16.mxu0 0
        %921 = vmatpush1.bf16.xpose.msra.mxu0 %v918
        %922 = vmatprep.subr.bf16.mxu0 0
        %923 = vmatpush1.bf16.xpose.msra.mxu0 0
        %924 = vmatprep.subr.bf16.mxu0 0
        %925 = vmatpush1.bf16.xpose.msra.mxu0 0
        %926 = vmatprep.subr.bf16.mxu0 0
        %927 = vmatpush1.bf16.xpose.msra.mxu0 0
        %928 = vmatprep.subr.bf16.mxu0 0
        %929 = vmatpush1.bf16.xpose.msra.mxu0 0
        %930 = vmatprep.subr.bf16.mxu0 0
        %931 = vmatpush1.bf16.xpose.msra.mxu0 0
        %932 = vmatprep.subr.bf16.mxu0 0
        %933 = vmatpush1.bf16.xpose.msra.mxu0 0
        %934 = vmatprep.subr.bf16.mxu0 0
        %935 = vmatpush1.bf16.xpose.msra.mxu0 0
        %936 = vmatprep.subr.bf16.mxu0 0
        %937 = vmatpush1.bf16.xpose.msra.mxu0 0
        %938 = vmatprep.subr.bf16.mxu0 0
        %939 = vmatpush1.bf16.xpose.msra.mxu0 0
        %940 = vmatprep.subr.bf16.mxu0 0
        %941 = vmatpush1.bf16.xpose.msra.mxu0 0
        %942 = vmatprep.subr.bf16.mxu0 0
        %943 = vmatpush1.bf16.xpose.msra.mxu0 0
        %944 = vmatprep.subr.bf16.mxu0 0
        %945 = vmatpush1.bf16.xpose.msra.mxu0 0
        %946 = vmatprep.subr.bf16.mxu0 0
        %947 = vmatpush1.bf16.xpose.msra.mxu0 0
        %948 = vmatprep.subr.bf16.mxu0 0
        %949 = vmatpush1.bf16.xpose.msra.mxu0 0
        %950 = vmatprep.subr.bf16.mxu0 0
        %951 = vmatpush1.bf16.xpose.msra.mxu0 0
        %952 = vmatprep.mubr.bf16.mxu0 0
        %953 = vmatmul.mubr.bf16.gmra.mrb[0].mxu0 %v915
        %v954 = vpop.f32.mrb[0].mxu0
        %v955 = vadd.f32 %v671, %v954
        %v956 = vpop.f32.mrb[0].mxu0
        %v957 = vpop.f32.mrb[0].mxu0
        %v958 = vpop.f32.mrb[0].mxu0
        %959 = vdwg.mxu0
        %v960 = vsel %vm685, %v955, -inf
        %961 = vmax.xlane.f32.xlu0 %v960
        %v962 = vpop.xlane.xlu0 %961
        %v963 = vsub.f32 %v955, %v962
        %v964 = vmul.f32 %v963, 1.442695
        %v965 = vpow.pop %v964
        %v966 = vsel %vm685, %v965, 0.0
        %967 = vadd.xlane.f32.xlu0 %v966
        %v968 = vpop.xlane.xlu0 %967
        %v969 = vrcp.pop %v968
        %v970 = vmul.f32 %v965, %v969
        %v971 = vpack.c.bf16 %v970, %v970
        %972 = vrot.lane.b32.xlu0 %v861, 112
        %v973 = vpop.permute.xlu0 %972
        %v975 = vsel %vm685, %v971, 0
        %v978 = vsel %vm747, %v973, 0
        %980 = vmatprep.subr.bf16.mxu0 0
        %981 = vmatpush1.bf16.msra.mxu0 %v978
        %982 = vmatprep.subr.bf16.mxu0 0
        %983 = vmatpush1.bf16.msra.mxu0 0
        %984 = vmatprep.subr.bf16.mxu0 0
        %985 = vmatpush1.bf16.msra.mxu0 0
        %986 = vmatprep.subr.bf16.mxu0 0
        %987 = vmatpush1.bf16.msra.mxu0 0
        %988 = vmatprep.subr.bf16.mxu0 0
        %989 = vmatpush1.bf16.msra.mxu0 0
        %990 = vmatprep.subr.bf16.mxu0 0
        %991 = vmatpush1.bf16.msra.mxu0 0
        %992 = vmatprep.subr.bf16.mxu0 0
        %993 = vmatpush1.bf16.msra.mxu0 0
        %994 = vmatprep.subr.bf16.mxu0 0
        %995 = vmatpush1.bf16.msra.mxu0 0
        %996 = vmatprep.subr.bf16.mxu0 0
        %997 = vmatpush1.bf16.msra.mxu0 0
        %998 = vmatprep.subr.bf16.mxu0 0
        %999 = vmatpush1.bf16.msra.mxu0 0
        %1000 = vmatprep.subr.bf16.mxu0 0
        %1001 = vmatpush1.bf16.msra.mxu0 0
        %1002 = vmatprep.subr.bf16.mxu0 0
        %1003 = vmatpush1.bf16.msra.mxu0 0
        %1004 = vmatprep.subr.bf16.mxu0 0
        %1005 = vmatpush1.bf16.msra.mxu0 0
        %1006 = vmatprep.subr.bf16.mxu0 0
        %1007 = vmatpush1.bf16.msra.mxu0 0
        %1008 = vmatprep.subr.bf16.mxu0 0
        %1009 = vmatpush1.bf16.msra.mxu0 0
        %1010 = vmatprep.subr.bf16.mxu0 0
        %1011 = vmatpush1.bf16.msra.mxu0 0
        %1012 = vmatprep.mubr.bf16.mxu0 0
        %1013 = vmatmul.mubr.bf16.gmra.mrb[0].mxu0 %v975
        %v1014 = vpop.f32.mrb[0].mxu0
        %v1015 = vadd.f32 0.0, %v1014
        %v1016 = vpop.f32.mrb[0].mxu0
        %v1017 = vpop.f32.mrb[0].mxu0
        %v1018 = vpop.f32.mrb[0].mxu0
        %1019 = vdwg.mxu0
        %1020 = vrot.lane.b32.xlu0 %v793, 104
        %v1021 = vpop.permute.xlu0 %1020
        %1022 = vrot.lane.b32.xlu0 %v798, 104
        %v1023 = vpop.permute.xlu0 %1022
        %v1025 = vsel %vm685, %v1021, 0
        %v1028 = vsel %vm685, %v1023, 0
        %1030 = vmatprep.subr.bf16.mxu0 0
        %1031 = vmatpush1.bf16.xpose.msra.mxu0 %v1028
        %1032 = vmatprep.subr.bf16.mxu0 0
        %1033 = vmatpush1.bf16.xpose.msra.mxu0 0
        %1034 = vmatprep.subr.bf16.mxu0 0
        %1035 = vmatpush1.bf16.xpose.msra.mxu0 0
        %1036 = vmatprep.subr.bf16.mxu0 0
        %1037 = vmatpush1.bf16.xpose.msra.mxu0 0
        %1038 = vmatprep.subr.bf16.mxu0 0
        %1039 = vmatpush1.bf16.xpose.msra.mxu0 0
        %1040 = vmatprep.subr.bf16.mxu0 0
        %1041 = vmatpush1.bf16.xpose.msra.mxu0 0
        %1042 = vmatprep.subr.bf16.mxu0 0
        %1043 = vmatpush1.bf16.xpose.msra.mxu0 0
        %1044 = vmatprep.subr.bf16.mxu0 0
        %1045 = vmatpush1.bf16.xpose.msra.mxu0 0
        %1046 = vmatprep.subr.bf16.mxu0 0
        %1047 = vmatpush1.bf16.xpose.msra.mxu0 0
        %1048 = vmatprep.subr.bf16.mxu0 0
        %1049 = vmatpush1.bf16.xpose.msra.mxu0 0
        %1050 = vmatprep.subr.bf16.mxu0 0
        %1051 = vmatpush1.bf16.xpose.msra.mxu0 0
        %1052 = vmatprep.subr.bf16.mxu0 0
        %1053 = vmatpush1.bf16.xpose.msra.mxu0 0
        %1054 = vmatprep.subr.bf16.mxu0 0
        %1055 = vmatpush1.bf16.xpose.msra.mxu0 0
        %1056 = vmatprep.subr.bf16.mxu0 0
        %1057 = vmatpush1.bf16.xpose.msra.mxu0 0
        %1058 = vmatprep.subr.bf16.mxu0 0
        %1059 = vmatpush1.bf16.xpose.msra.mxu0 0
        %1060 = vmatprep.subr.bf16.mxu0 0
        %1061 = vmatpush1.bf16.xpose.msra.mxu0 0
        %1062 = vmatprep.mubr.bf16.mxu0 0
        %1063 = vmatmul.mubr.bf16.gmra.mrb[0].mxu0 %v1025
        %v1064 = vpop.f32.mrb[0].mxu0
        %v1065 = vadd.f32 %v671, %v1064
        %v1066 = vpop.f32.mrb[0].mxu0
        %v1067 = vpop.f32.mrb[0].mxu0
        %v1068 = vpop.f32.mrb[0].mxu0
        %1069 = vdwg.mxu0
        %v1070 = vsel %vm685, %v1065, -inf
        %1071 = vmax.xlane.f32.xlu0 %v1070
        %v1072 = vpop.xlane.xlu0 %1071
        %v1073 = vsub.f32 %v1065, %v1072
        %v1074 = vmul.f32 %v1073, 1.442695
        %v1075 = vpow.pop %v1074
        %v1076 = vsel %vm685, %v1075, 0.0
        %1077 = vadd.xlane.f32.xlu0 %v1076
        %v1078 = vpop.xlane.xlu0 %1077
        %v1079 = vrcp.pop %v1078
        %v1080 = vmul.f32 %v1075, %v1079
        %v1081 = vpack.c.bf16 %v1080, %v1080
        %1082 = vrot.lane.b32.xlu0 %v861, 104
        %v1083 = vpop.permute.xlu0 %1082
        %v1085 = vsel %vm685, %v1081, 0
        %v1088 = vsel %vm747, %v1083, 0
        %1090 = vmatprep.subr.bf16.mxu0 0
        %1091 = vmatpush1.bf16.msra.mxu0 %v1088
        %1092 = vmatprep.subr.bf16.mxu0 0
        %1093 = vmatpush1.bf16.msra.mxu0 0
        %1094 = vmatprep.subr.bf16.mxu0 0
        %1095 = vmatpush1.bf16.msra.mxu0 0
        %1096 = vmatprep.subr.bf16.mxu0 0
        %1097 = vmatpush1.bf16.msra.mxu0 0
        %1098 = vmatprep.subr.bf16.mxu0 0
        %1099 = vmatpush1.bf16.msra.mxu0 0
        %1100 = vmatprep.subr.bf16.mxu0 0
        %1101 = vmatpush1.bf16.msra.mxu0 0
        %1102 = vmatprep.subr.bf16.mxu0 0
        %1103 = vmatpush1.bf16.msra.mxu0 0
        %1104 = vmatprep.subr.bf16.mxu0 0
        %1105 = vmatpush1.bf16.msra.mxu0 0
        %1106 = vmatprep.subr.bf16.mxu0 0
        %1107 = vmatpush1.bf16.msra.mxu0 0
        %1108 = vmatprep.subr.bf16.mxu0 0
        %1109 = vmatpush1.bf16.msra.mxu0 0
        %1110 = vmatprep.subr.bf16.mxu0 0
        %1111 = vmatpush1.bf16.msra.mxu0 0
        %1112 = vmatprep.subr.bf16.mxu0 0
        %1113 = vmatpush1.bf16.msra.mxu0 0
        %1114 = vmatprep.subr.bf16.mxu0 0
        %1115 = vmatpush1.bf16.msra.mxu0 0
        %1116 = vmatprep.subr.bf16.mxu0 0
        %1117 = vmatpush1.bf16.msra.mxu0 0
        %1118 = vmatprep.subr.bf16.mxu0 0
        %1119 = vmatpush1.bf16.msra.mxu0 0
        %1120 = vmatprep.subr.bf16.mxu0 0
        %1121 = vmatpush1.bf16.msra.mxu0 0
        %1122 = vmatprep.mubr.bf16.mxu0 0
        %1123 = vmatmul.mubr.bf16.gmra.mrb[0].mxu0 %v1085
        %v1124 = vpop.f32.mrb[0].mxu0
        %v1125 = vadd.f32 0.0, %v1124
        %v1126 = vpop.f32.mrb[0].mxu0
        %v1127 = vpop.f32.mrb[0].mxu0
        %v1128 = vpop.f32.mrb[0].mxu0
        %1129 = vdwg.mxu0
        %1131 = vrot.lane.b32.xlu0 %v905, 8
        %v1132 = vpop.permute.xlu0 %1131
        %1135 = vrot.lane.b32.xlu0 %v1015, 16
        %v1136 = vpop.permute.xlu0 %1135
        %1139 = vrot.lane.b32.xlu0 %v1125, 24
        %v1140 = vpop.permute.xlu0 %1139
        %v1142 = vsel %vm685, %v786, %v1132
        %vm1143 = vcmask 130048
        %v1144 = vsel %vm1143, %v1142, %v1136
        %vm1145 = vcmask 195584
        %v1146 = vsel %vm1145, %v1144, %v1140
        %v1147 = vpack.c.bf16 %v1146, %v1146
        %v1148 = vld [vmem:[#allocation5] sm:$0xff]
        %v1149 = vld [vmem:[#allocation14] sm:$0xf]
        %v1150 = vld [vmem:[#allocation14 + $0x4] sm:$0xf]
        %v1151 = vld [vmem:[#allocation14 + $0x8] sm:$0xf]
        %v1152 = vld [vmem:[#allocation14 + $0xc] sm:$0xf]
        %v1157 = vunpack.c.l.b16 %v1149
        %v1158 = vunpack.c.l.b16 %v1150
        %v1159 = vunpack.c.l.b16 %v1151
        %v1160 = vunpack.c.l.b16 %v1152
        %v1161 = vpack.c.b16 %v1158, %v1157
        %v1162 = vpack.c.b16 %v1160, %v1159
        %v1166 = vsel %vm619, %v1147, 0
        %1168 = vmatprep.subr.bf16.mxu0 0
        %1169 = vmatpush1.bf16.msra.mxu0 %v1161
        %1170 = vmatprep.subr.bf16.mxu0 0
        %1171 = vmatpush1.bf16.msra.mxu0 %v1162
        %1172 = vmatprep.subr.bf16.mxu0 0
        %1173 = vmatpush1.bf16.msra.mxu0 0
        %1174 = vmatprep.subr.bf16.mxu0 0
        %1175 = vmatpush1.bf16.msra.mxu0 0
        %1176 = vmatprep.subr.bf16.mxu0 0
        %1177 = vmatpush1.bf16.msra.mxu0 0
        %1178 = vmatprep.subr.bf16.mxu0 0
        %1179 = vmatpush1.bf16.msra.mxu0 0
        %1180 = vmatprep.subr.bf16.mxu0 0
        %1181 = vmatpush1.bf16.msra.mxu0 0
        %1182 = vmatprep.subr.bf16.mxu0 0
        %1183 = vmatpush1.bf16.msra.mxu0 0
        %1184 = vmatprep.subr.bf16.mxu0 0
        %1185 = vmatpush1.bf16.msra.mxu0 0
        %1186 = vmatprep.subr.bf16.mxu0 0
        %1187 = vmatpush1.bf16.msra.mxu0 0
        %1188 = vmatprep.subr.bf16.mxu0 0
        %1189 = vmatpush1.bf16.msra.mxu0 0
        %1190 = vmatprep.subr.bf16.mxu0 0
        %1191 = vmatpush1.bf16.msra.mxu0 0
        %1192 = vmatprep.subr.bf16.mxu0 0
        %1193 = vmatpush1.bf16.msra.mxu0 0
        %1194 = vmatprep.subr.bf16.mxu0 0
        %1195 = vmatpush1.bf16.msra.mxu0 0
        %1196 = vmatprep.subr.bf16.mxu0 0
        %1197 = vmatpush1.bf16.msra.mxu0 0
        %1198 = vmatprep.subr.bf16.mxu0 0
        %1199 = vmatpush1.bf16.msra.mxu0 0
        %1200 = vmatprep.mubr.bf16.mxu0 0
        %1201 = vmatmul.mubr.bf16.gmra.mrb[0].mxu0 %v1166
        %v1202 = vpop.f32.mrb[0].mxu0
        %v1203 = vadd.f32 0.0, %v1202
        %v1204 = vpop.f32.mrb[0].mxu0
        %v1205 = vpop.f32.mrb[0].mxu0
        %v1206 = vpop.f32.mrb[0].mxu0
        %1207 = vdwg.mxu0
        %v1208 = vadd.f32 %v1148, %v1203
        %1209 = vst.msk [vmem:[#allocation5] sm:$0xff] %vm619, %v1208
        %v1210 = vld [vmem:[#allocation5] sm:$0xff]
        %v1211 = vsel %vm619, %v1210, 0.0
        %1212 = vadd.xlane.f32.xlu0 %v1211
        %v1213 = vpop.xlane.xlu0 %1212
        %v1214 = vrcp.pop 32.0
        %v1215 = vmul.f32 %v1213, %v1214
        %v1216 = vsub.f32 %v1210, %v1215
        %v1217 = vmul.f32 %v1216, %v1216
        %v1218 = vsel %vm619, %v1217, 0.0
        %1219 = vadd.xlane.f32.xlu0 %v1218
        %v1220 = vpop.xlane.xlu0 %1219
        %v1221 = vmul.f32 %v1220, %v1214
        %v1222 = vadd.f32 %v1221, 1e-12
        %v1223 = vrsqrt.pop %v1222
        %v1224 = vmul.f32 %v1216, %v1223
        %v1225 = vld [vmem:[%s9] sm:$0x1]
        %v1227 = vlaneseq
        %v1228 = vshrl.u32 %v1227, 7
        %v1229 = vsub.s32 0, %v1228
        %v1230 = vrot.slane %v1225, %v1229
        %v1232 = vmul.f32 %v1224, %v1230
        %v1233 = vld [vmem:[%s10] sm:$0x1]
        %v1235 = vlaneseq
        %v1236 = vshrl.u32 %v1235, 7
        %v1237 = vsub.s32 0, %v1236
        %v1238 = vrot.slane %v1233, %v1237
        %v1240 = vadd.f32 %v1232, %v1238
        %1241 = vst.msk [vmem:[%s507] sm:$0xff] %vm619, %v1240
        %s1242 = sand.u32 %s302, 1
        %s1243 = scalar_lea.sflag [#allocation8], %s1242
        %s1244 = sand.u32 %s302, 1
        %s1245 = smul.addr %s1244, 8
        %s1246 = scalar_lea.vmem [#allocation15], %s1245
        // Predicated region
        $region89: #{tpu_custom_call.1} parent=63 // pred_check
          %p1247 = pneg %p312
        $region90: #{tpu_custom_call.1} parent=63 // pred_check_branch
          %1249 = sbr.rel (%p1247) target = $region92
        $region91: #{tpu_custom_call.1} parent=63 // pred_region
          %s1251 = ssub.s32 128, 128
          %1252 = vsyncadd %s1243, %s1251
          %s1253 = sadd.s32 %s37, %s36
          %s1254 = smul.addr %s1253, 128
          %s1255 = scalar_lea.hbm %s11, %s1254
          %s1257 = sshll.u32 %s1246, 4
          %s1258 = int_to_ptr.vmem [resolvable:$true] %s1257
          %1260 = dma.vmem_to_hbm [thread:$0]  %s1258, 128, %s1255, %s1243
        $region92: #{tpu_custom_call.1} parent=63 // pred_fallthru
          _
      $region64: #{tpu_custom_call.1} parent=5 // pred_fallthru
        _
      %p1261 = scmp.le.s32.totalorder 2, %s27
      // Predicated region
      $region93: #{tpu_custom_call.1} parent=5 // pred_check
        %p1262 = pneg %p1261
      $region94: #{tpu_custom_call.1} parent=5 // pred_check_branch
        %1264 = sbr.rel (%p1262) target = $region96
      $region95: #{tpu_custom_call.1} parent=5 // pred_region
        %s1265 = ssub.s32 %s27, 2
        // Predicated region
        $region97: #{tpu_custom_call.1} parent=95 // pred_check
          %p1266 = pneg %p318
        $region98: #{tpu_custom_call.1} parent=95 // pred_check_branch
          %1268 = sbr.rel (%p1266) target = $region100
        $region99: #{tpu_custom_call.1} parent=95 // pred_region
          %s1269 = sand.u32 %s303, 1
          %s1270 = scalar_lea.sflag [#allocation8], %s1269
          %s1271 = sand.u32 %s303, 1
          %s1272 = smul.addr %s1271, 8
          %s1273 = scalar_lea.vmem [#allocation15], %s1272
          %1274 = dma.done %s1270, 128
        $region100: #{tpu_custom_call.1} parent=95 // pred_fallthru
          _
      $region96: #{tpu_custom_call.1} parent=5 // pred_fallthru
        _
    $region6: #{tpu_custom_call.1} parent=1 // loop_footer
      %s31 = sadd.s32 1, %s27
    $region7: #{tpu_custom_call.1} parent=1 // loop_footer_branch
      %26 = sbr.rel target = $region3
    $region8: #{tpu_custom_call.1} parent=1 // loop_exit
      _
    %1275 = vsyncpa [#allocation7], 1
    %s1276 = scalar_lea.sflag [#allocation7], 1
    %1277 = vsyncpa %s1276, 1
    %1278 = vsyncpa [#allocation10], 1
    %s1279 = scalar_lea.sflag [#allocation10], 1
    %1280 = vsyncpa %s1279, 1
    %1281 = vsyncpa [#allocation13], 1
    %1282 = vsyncpa [#allocation8], 1
    %s1283 = scalar_lea.sflag [#allocation8], 1
    %1284 = vsyncpa %s1283, 1

</llo_original>
